<compile_context>
chip_gen: v7x
topology: tpu7x:2x2x1
jax: 0.10.0
libtpu: 0.0.40
codegen_flags: <defaults>
</compile_context>

<pallas_src>
import functools

import jax
import jax.numpy as jnp
from jax import lax
from jax.experimental import pallas as pl
from jax.experimental.pallas import tpu as pltpu


def _band_conv_weight(w_hwio, W):
  """(3, 3, Cin, Cout) conv kernel -> (3*W*Cin, W*Cout) block-band matrix.

  With the image packed as rows of length W*Cin (lane index = w*Cin + c) and
  the three input rows h-1 / h / h+1 (zero rows outside the image), the 3x3
  'same' conv is out[h] = row[h-1] @ B0 + row[h] @ B1 + row[h+1] @ B2, where
  Bdy[w_in*Cin + c, w_out*Cout + o] = w[dy, dx, c, o], dx = w_in - w_out + 1,
  and only |w_in - w_out| <= 1 blocks are nonzero, so the zero padding along W
  is folded into the band structure.  The three Bdy are stacked along axis 0.
  """
  kh, kw, cin, cout = w_hwio.shape
  per_dy = []
  for dy in range(kh):
    m = jnp.zeros((W * cin, W * cout), w_hwio.dtype)
    for dx in range(kw):
      sel = jnp.eye(W, W, k=1 - dx, dtype=w_hwio.dtype)  # w_out = w_in + 1 - dx
      m = m + jnp.kron(sel, w_hwio[dy, dx])
    per_dy.append(m)
  return jnp.concatenate(per_dy, axis=0)


def _resnet_block_kernel(x_ref, w1_ref, w2_ref, b_ref, out_ref, *,
                         B, H, WC, matmul_dtype):
  """B images per grid step; everything stays lane-dense with last dim W*C.

  x_ref   : (B, H, W*C)      input images (also the residual path), f32
  w*_ref  : (3*W*C, W*C)     block-band conv matrices with BN scale folded in
  b_ref   : (2, W*C)         folded BN biases for conv1 / conv2, f32
  out_ref : (B, H, W*C)
  """
  M = B * H

  def conv3x3(img3, w_ref):
    # img3: (B, H, WC) f32.  Build the h-1 / h+1 operands per image with a
    # zero boundary row (value-level, no VMEM staging buffer), then run three
    # accumulating MXU dots against the three dy-bands of the weight matrix.
    zero_row = jnp.zeros((B, 1, WC), img3.dtype)
    up = jnp.concatenate([zero_row, img3[:, :H - 1, :]], axis=1)   # row h-1
    dn = jnp.concatenate([img3[:, 1:, :], zero_row], axis=1)       # row h+1
    acc = jnp.dot(up.reshape(M, WC).astype(matmul_dtype),
                  w_ref[0:WC, :], preferred_element_type=jnp.float32)
    acc = acc + jnp.dot(img3.reshape(M, WC).astype(matmul_dtype),
                        w_ref[WC:2 * WC, :],
                        preferred_element_type=jnp.float32)
    acc = acc + jnp.dot(dn.reshape(M, WC).astype(matmul_dtype),
                        w_ref[2 * WC:3 * WC, :],
                        preferred_element_type=jnp.float32)
    return acc  # (M, WC) f32; BN scale is already folded into w_ref columns.

  # conv1 -> bn1 (bias only) -> relu
  h1 = jnp.maximum(conv3x3(x_ref[...], w1_ref) + b_ref[0:1, :], 0.0)
  # conv2 -> bn2 (bias only)
  h2 = conv3x3(h1.reshape(B, H, WC), w2_ref) + b_ref[1:2, :]
  # residual add (identity shortcut) + relu
  out_ref[...] = jnp.maximum(h2.reshape(B, H, WC) + x_ref[...],
                             0.0).astype(out_ref.dtype)


def _pick_batch_block(N):
  """Largest batch block that keeps the grid length >= 2 (v7x megacore)."""
  for d in (16, 8, 4, 2):
    if N % d == 0 and N // d >= 2:
      return d
  return 1


def resnet_block_packed(x_p, w1b, w2b, bias, *, matmul_dtype=jnp.bfloat16,
                        b_blk=None):
  """x_p: (N, H, W*C) f32; w*b: (3*W*C, W*C) BN-folded; bias: (2, W*C) f32."""
  N, H, WC = x_p.shape
  K = w1b.shape[0]
  assert WC % 128 == 0, "pack so that W*C is a multiple of the 128-lane width"
  assert K == 3 * WC
  if b_blk is None:
    b_blk = _pick_batch_block(N)
  assert N % b_blk == 0
  grid_n = N // b_blk

  kernel = functools.partial(_resnet_block_kernel, B=b_blk, H=H, WC=WC,
                             matmul_dtype=matmul_dtype)

  cost = pl.CostEstimate(
      flops=int(2 * 2 * N * H * K * WC),            # two band matmuls / image
      transcendentals=0,
      bytes_accessed=int(4 * 2 * x_p.size
                         + w1b.dtype.itemsize * (w1b.size + w2b.size)
                         + 4 * bias.size),
  )

  return pl.pallas_call(
      kernel,
      out_shape=jax.ShapeDtypeStruct((N, H, WC), jnp.float32),
      grid_spec=pltpu.PrefetchScalarGridSpec(
          num_scalar_prefetch=0,
          grid=(grid_n,),
          in_specs=[
              pl.BlockSpec((b_blk, H, WC), lambda n: (n, 0, 0)),  # x / residual
              pl.BlockSpec((K, WC), lambda n: (0, 0)),            # conv1 bands
              pl.BlockSpec((K, WC), lambda n: (0, 0)),            # conv2 bands
              pl.BlockSpec((2, WC), lambda n: (0, 0)),            # biases
          ],
          out_specs=pl.BlockSpec((b_blk, H, WC), lambda n: (n, 0, 0)),
      ),
      compiler_params=pltpu.CompilerParams(
          dimension_semantics=("parallel",)),   # v7x shards over its 2 TCs
      cost_estimate=cost,
  )(x_p, w1b, w2b, bias)


def resnet_block_nchw(x_nchw, params, *, matmul_dtype=jnp.bfloat16, eps=1e-5):
  """Matches the PyTorch ResnetBlock (stride=1, inchannel==outchannel), NCHW."""
  (w1, w2, g1, be1, m1, v1, g2, be2, m2, v2) = params
  N, C, H, W = x_nchw.shape

  inv1 = g1 / jnp.sqrt(v1 + eps)
  inv2 = g2 / jnp.sqrt(v2 + eps)
  # lane index l = w*C + c -> per-lane scale/bias = per-channel value tiled W x.
  s1 = jnp.tile(inv1, W)
  s2 = jnp.tile(inv2, W)
  b1 = jnp.tile(be1 - m1 * inv1, W)
  b2 = jnp.tile(be2 - m2 * inv2, W)
  bias = jnp.stack([b1, b2], axis=0)              # (2, W*C), stays f32 in-kernel

  # PyTorch conv weight (O, I, kH, kW) -> HWIO -> block-band matrix.  Fold the
  # BN scale into the output columns in f32, then cast the MXU operand.
  w1b = _band_conv_weight(jnp.transpose(w1, (2, 3, 1, 0)), W) * s1[None, :]
  w2b = _band_conv_weight(jnp.transpose(w2, (2, 3, 1, 0)), W) * s2[None, :]
  w1b = w1b.astype(matmul_dtype)
  w2b = w2b.astype(matmul_dtype)

  x_p = jnp.transpose(x_nchw, (0, 2, 3, 1)).reshape(N, H, W * C)
  y_p = resnet_block_packed(x_p, w1b, w2b, bias, matmul_dtype=matmul_dtype)
  return jnp.transpose(y_p.reshape(N, H, W, C), (0, 3, 1, 2))


def reference_nchw(x_nchw, params, eps=1e-5):
  """Pure-JAX reference (lax conv, full-precision) for verification."""
  (w1, w2, g1, be1, m1, v1, g2, be2, m2, v2) = params

  def conv(x, w):
    return lax.conv_general_dilated(
        x, w, window_strides=(1, 1), padding=((1, 1), (1, 1)),
        dimension_numbers=("NCHW", "OIHW", "NCHW"),
        precision=lax.Precision.HIGHEST)

  def bn(x, g, b, m, v):
    g = g.reshape(1, -1, 1, 1); b = b.reshape(1, -1, 1, 1)
    m = m.reshape(1, -1, 1, 1); v = v.reshape(1, -1, 1, 1)
    return (x - m) / jnp.sqrt(v + eps) * g + b

  out = jnp.maximum(bn(conv(x_nchw, w1), g1, be1, m1, v1), 0.0)
  out = bn(conv(out, w2), g2, be2, m2, v2)
  return jnp.maximum(out + x_nchw, 0.0)


if __name__ == "__main__":
  # inchannel = outchannel = 8, 16x16 spatial -> packed lane dim W*C = 128.
  # N = 16 so the batched grid is (2,): 8 images (M = 128 MXU rows) per step,
  # and the "parallel" axis is still splittable across v7x's two TensorCores.
  N, C, H, W = 16, 8, 16, 16

  key = jax.random.PRNGKey(0)
  kx, kw1, kw2 = jax.random.split(key, 3)
  x = jax.random.normal(kx, (N, C, H, W), jnp.float32)

  # Deterministic synthetic parameters (not a checkpoint).
  w1 = 0.1 * jax.random.normal(kw1, (C, C, 3, 3), jnp.float32)   # conv1 (OIHW)
  w2 = 0.1 * jax.random.normal(kw2, (C, C, 3, 3), jnp.float32)   # conv2 (OIHW)
  ar = jnp.arange(C, dtype=jnp.float32)
  g1, be1 = 1.0 + 0.10 * ar, 0.05 * ar
  m1, v1 = 0.02 * ar, 1.0 + 0.03 * ar
  g2, be2 = 1.0 - 0.05 * ar, -0.02 * ar
  m2, v2 = -0.01 * ar, 1.0 + 0.07 * ar
  params = (w1, w2, g1, be1, m1, v1, g2, be2, m2, v2)

  y_ref = reference_nchw(x, params)

  # f32 MXU operands: tight comparison against the full-precision reference.
  y_f32 = jax.block_until_ready(
      resnet_block_nchw(x, params, matmul_dtype=jnp.float32))
  assert y_f32.shape == (N, C, H, W)
  assert jnp.allclose(y_f32, y_ref, atol=2e-3, rtol=2e-3), "f32 kernel mismatch"

  # Default path: bf16 MXU operands (best throughput on v5e/v6e/v7x); BN /
  # ReLU / residual stay f32, so only the matmuls see bf16 rounding.
  y = jax.block_until_ready(resnet_block_nchw(x, params))
  assert y.shape == (N, C, H, W)
  assert jnp.allclose(y, y_ref, atol=1e-1, rtol=1e-1), "bf16 kernel mismatch"

  print("KERNEL_OK")
</pallas_src>

<mosaic_0001>
module attributes {stable_mosaic.version = 11 : i64} {
  func.func @_resnet_block_kernel(%arg0: i32, %arg1: memref<8x16x128xf32, #tpu.memory_space<vmem>>, %arg2: memref<384x128xf32, #tpu.memory_space<vmem>>, %arg3: memref<384x128xf32, #tpu.memory_space<vmem>>, %arg4: memref<2x128xf32, #tpu.memory_space<vmem>>, %arg5: memref<8x16x128xf32, #tpu.memory_space<vmem>>) attributes {dimension_semantics = [#tpu.dimension_semantics<parallel>], iteration_bounds = array<i64: 2>, scalar_prefetch = 0 : i64, scratch_operands = 0 : i64, tpu.core_type = #tpu.core_type<tc>, window_params = [{transform_indices = @transform_0, window_bounds = array<i64: 8, 16, 128>}, {pipeline_mode = #tpu.pipeline_mode<synchronous>, transform_indices = @transform_1, window_bounds = array<i64: 384, 128>}, {pipeline_mode = #tpu.pipeline_mode<synchronous>, transform_indices = @transform_2, window_bounds = array<i64: 384, 128>}, {pipeline_mode = #tpu.pipeline_mode<synchronous>, transform_indices = @transform_3, window_bounds = array<i64: 2, 128>}, {transform_indices = @transform_4, window_bounds = array<i64: 8, 16, 128>}]} {
    %c0 = arith.constant 0 : index
    %c0_0 = arith.constant 0 : index
    %c0_1 = arith.constant 0 : index
    %0 = vector.load %arg1[%c0, %c0_0, %c0_1] : memref<8x16x128xf32, #tpu.memory_space<vmem>>, vector<8x16x128xf32>
    %cst = arith.constant 0.000000e+00 : f32
    %1 = vector.broadcast %cst : f32 to vector<8x1x128xf32>
    %2 = vector.extract_strided_slice %0 {offsets = [0, 0, 0], sizes = [8, 15, 128], strides = [1, 1, 1]} : vector<8x16x128xf32> to vector<8x15x128xf32>
    %3 = tpu.concatenate %1, %2 in 1 : vector<8x1x128xf32>, vector<8x15x128xf32> -> vector<8x16x128xf32>
    %4 = vector.extract_strided_slice %0 {offsets = [0, 1, 0], sizes = [8, 15, 128], strides = [1, 1, 1]} : vector<8x16x128xf32> to vector<8x15x128xf32>
    %5 = tpu.concatenate %4, %1 in 1 : vector<8x15x128xf32>, vector<8x1x128xf32> -> vector<8x16x128xf32>
    %6 = vector.shape_cast %3 : vector<8x16x128xf32> to vector<128x128xf32>
    %c0_2 = arith.constant 0 : index
    %c0_3 = arith.constant 0 : index
    %7 = vector.load %arg2[%c0_2, %c0_3] : memref<384x128xf32, #tpu.memory_space<vmem>>, vector<128x128xf32>
    %cst_4 = arith.constant dense<0.000000e+00> : vector<128x128xf32>
    %8 = tpu.matmul %6, %7, %cst_4 {dimension_numbers = #tpu.dot_dimension_numbers<[1], [0], [0], [1], [0, 0, 1, 1], [], []>} : vector<128x128xf32>, vector<128x128xf32>, vector<128x128xf32> -> vector<128x128xf32>
    %9 = vector.shape_cast %0 : vector<8x16x128xf32> to vector<128x128xf32>
    %c128 = arith.constant 128 : index
    %c0_5 = arith.constant 0 : index
    %10 = vector.load %arg2[%c128, %c0_5] : memref<384x128xf32, #tpu.memory_space<vmem>>, vector<128x128xf32>
    %cst_6 = arith.constant dense<0.000000e+00> : vector<128x128xf32>
    %11 = tpu.matmul %9, %10, %cst_6 {dimension_numbers = #tpu.dot_dimension_numbers<[1], [0], [0], [1], [0, 0, 1, 1], [], []>} : vector<128x128xf32>, vector<128x128xf32>, vector<128x128xf32> -> vector<128x128xf32>
    %12 = arith.addf %8, %11 : vector<128x128xf32>
    %13 = vector.shape_cast %5 : vector<8x16x128xf32> to vector<128x128xf32>
    %c256 = arith.constant 256 : index
    %c0_7 = arith.constant 0 : index
    %14 = vector.load %arg2[%c256, %c0_7] : memref<384x128xf32, #tpu.memory_space<vmem>>, vector<128x128xf32>
    %cst_8 = arith.constant dense<0.000000e+00> : vector<128x128xf32>
    %15 = tpu.matmul %13, %14, %cst_8 {dimension_numbers = #tpu.dot_dimension_numbers<[1], [0], [0], [1], [0, 0, 1, 1], [], []>} : vector<128x128xf32>, vector<128x128xf32>, vector<128x128xf32> -> vector<128x128xf32>
    %16 = arith.addf %12, %15 : vector<128x128xf32>
    %c0_9 = arith.constant 0 : index
    %c0_10 = arith.constant 0 : index
    %17 = vector.load %arg4[%c0_9, %c0_10] : memref<2x128xf32, #tpu.memory_space<vmem>>, vector<1x128xf32>
    %18 = vector.broadcast %17 : vector<1x128xf32> to vector<128x128xf32>
    %19 = arith.addf %16, %18 : vector<128x128xf32>
    %cst_11 = arith.constant 0.000000e+00 : f32
    %20 = vector.broadcast %cst_11 : f32 to vector<128x128xf32>
    %21 = arith.maximumf %19, %20 : vector<128x128xf32>
    %22 = vector.shape_cast %21 : vector<128x128xf32> to vector<8x16x128xf32>
    %cst_12 = arith.constant 0.000000e+00 : f32
    %23 = vector.broadcast %cst_12 : f32 to vector<8x1x128xf32>
    %24 = vector.extract_strided_slice %22 {offsets = [0, 0, 0], sizes = [8, 15, 128], strides = [1, 1, 1]} : vector<8x16x128xf32> to vector<8x15x128xf32>
    %25 = tpu.concatenate %23, %24 in 1 : vector<8x1x128xf32>, vector<8x15x128xf32> -> vector<8x16x128xf32>
    %26 = vector.extract_strided_slice %22 {offsets = [0, 1, 0], sizes = [8, 15, 128], strides = [1, 1, 1]} : vector<8x16x128xf32> to vector<8x15x128xf32>
    %27 = tpu.concatenate %26, %23 in 1 : vector<8x15x128xf32>, vector<8x1x128xf32> -> vector<8x16x128xf32>
    %28 = vector.shape_cast %25 : vector<8x16x128xf32> to vector<128x128xf32>
    %c0_13 = arith.constant 0 : index
    %c0_14 = arith.constant 0 : index
    %29 = vector.load %arg3[%c0_13, %c0_14] : memref<384x128xf32, #tpu.memory_space<vmem>>, vector<128x128xf32>
    %cst_15 = arith.constant dense<0.000000e+00> : vector<128x128xf32>
    %30 = tpu.matmul %28, %29, %cst_15 {dimension_numbers = #tpu.dot_dimension_numbers<[1], [0], [0], [1], [0, 0, 1, 1], [], []>} : vector<128x128xf32>, vector<128x128xf32>, vector<128x128xf32> -> vector<128x128xf32>
    %31 = vector.shape_cast %22 : vector<8x16x128xf32> to vector<128x128xf32>
    %c128_16 = arith.constant 128 : index
    %c0_17 = arith.constant 0 : index
    %32 = vector.load %arg3[%c128_16, %c0_17] : memref<384x128xf32, #tpu.memory_space<vmem>>, vector<128x128xf32>
    %cst_18 = arith.constant dense<0.000000e+00> : vector<128x128xf32>
    %33 = tpu.matmul %31, %32, %cst_18 {dimension_numbers = #tpu.dot_dimension_numbers<[1], [0], [0], [1], [0, 0, 1, 1], [], []>} : vector<128x128xf32>, vector<128x128xf32>, vector<128x128xf32> -> vector<128x128xf32>
    %34 = arith.addf %30, %33 : vector<128x128xf32>
    %35 = vector.shape_cast %27 : vector<8x16x128xf32> to vector<128x128xf32>
    %c256_19 = arith.constant 256 : index
    %c0_20 = arith.constant 0 : index
    %36 = vector.load %arg3[%c256_19, %c0_20] : memref<384x128xf32, #tpu.memory_space<vmem>>, vector<128x128xf32>
    %cst_21 = arith.constant dense<0.000000e+00> : vector<128x128xf32>
    %37 = tpu.matmul %35, %36, %cst_21 {dimension_numbers = #tpu.dot_dimension_numbers<[1], [0], [0], [1], [0, 0, 1, 1], [], []>} : vector<128x128xf32>, vector<128x128xf32>, vector<128x128xf32> -> vector<128x128xf32>
    %38 = arith.addf %34, %37 : vector<128x128xf32>
    %c1 = arith.constant 1 : index
    %c0_22 = arith.constant 0 : index
    %39 = vector.load %arg4[%c1, %c0_22] : memref<2x128xf32, #tpu.memory_space<vmem>>, vector<1x128xf32>
    %40 = vector.broadcast %39 : vector<1x128xf32> to vector<128x128xf32>
    %41 = arith.addf %38, %40 : vector<128x128xf32>
    %42 = vector.shape_cast %41 : vector<128x128xf32> to vector<8x16x128xf32>
    %c0_23 = arith.constant 0 : index
    %c0_24 = arith.constant 0 : index
    %c0_25 = arith.constant 0 : index
    %43 = vector.load %arg1[%c0_23, %c0_24, %c0_25] : memref<8x16x128xf32, #tpu.memory_space<vmem>>, vector<8x16x128xf32>
    %44 = arith.addf %42, %43 : vector<8x16x128xf32>
    %cst_26 = arith.constant 0.000000e+00 : f32
    %45 = vector.broadcast %cst_26 : f32 to vector<8x16x128xf32>
    %46 = arith.maximumf %44, %45 : vector<8x16x128xf32>
    %c0_27 = arith.constant 0 : index
    %c0_28 = arith.constant 0 : index
    %c0_29 = arith.constant 0 : index
    %47 = vector.load %arg5[%c0_27, %c0_28, %c0_29] : memref<8x16x128xf32, #tpu.memory_space<vmem>>, vector<8x16x128xf32>
    tpu.vector_store %arg5[%c0_27, %c0_28, %c0_29], %46 {strides = array<i32>} : memref<8x16x128xf32, #tpu.memory_space<vmem>>, vector<8x16x128xf32>,
    return
  }
  func.func @transform_0(%arg0: i32) -> (i32, i32, i32) {
    %c0_i32 = arith.constant 0 : i32
    %c0_i32_0 = arith.constant 0 : i32
    %c0_i32_1 = arith.constant 0 : i32
    return %arg0, %c0_i32, %c0_i32_0 : i32, i32, i32
  }
  func.func @transform_1(%arg0: i32) -> (i32, i32) {
    %c0_i32 = arith.constant 0 : i32
    %c0_i32_0 = arith.constant 0 : i32
    %c0_i32_1 = arith.constant 0 : i32
    return %c0_i32, %c0_i32_0 : i32, i32
  }
  func.func @transform_2(%arg0: i32) -> (i32, i32) {
    %c0_i32 = arith.constant 0 : i32
    %c0_i32_0 = arith.constant 0 : i32
    %c0_i32_1 = arith.constant 0 : i32
    return %c0_i32, %c0_i32_0 : i32, i32
  }
  func.func @transform_3(%arg0: i32) -> (i32, i32) {
    %c0_i32 = arith.constant 0 : i32
    %c0_i32_0 = arith.constant 0 : i32
    %c0_i32_1 = arith.constant 0 : i32
    return %c0_i32, %c0_i32_0 : i32, i32
  }
  func.func @transform_4(%arg0: i32) -> (i32, i32, i32) {
    %c0_i32 = arith.constant 0 : i32
    %c0_i32_0 = arith.constant 0 : i32
    %c0_i32_1 = arith.constant 0 : i32
    return %arg0, %c0_i32, %c0_i32_0 : i32, i32, i32
  }
}

</mosaic_0001>

<llo_original>
// kernel: tpu_custom_call.1
$region0: #{tpu_custom_call.1}
  #allocation0 [shape = 'u32[]', space=smem, size = 0x4, offset = 0x4, fixed_abs, tag = 'smem constant byte address 0x4 - core index']
  #allocation1 [shape = 'u32[144,128]{1,0:T(1,128)}', space=vmem, size = 0x12000, scoped, tag = 'internal scratch']
  %s0 = inlined_call_operand.hbm [shape: f32[16,16,128], index: 0, kind: input, shape index: {}]
  %s1 = inlined_call_operand.hbm [shape: f32[384,128], index: 1, kind: input, shape index: {}]
  %s2 = inlined_call_operand.hbm [shape: f32[384,128], index: 2, kind: input, shape index: {}]
  %s3 = inlined_call_operand.vmem [shape: f32[2,128], index: 3, kind: input, shape index: {}]
  %s4 = inlined_call_operand.hbm [shape: f32[16,16,128], index: 4, kind: output, shape index: {}]
  %s5 = sld [smem:[#allocation0]]
  $region61: #{tpu_custom_call.1} parent=0
    _
  %s7 = ssub.s32 1, %s5
  %s8 = scalar_select 0, %s7, %s5
  $region1: #{tpu_custom_call.1} parent=0
    #allocation2 [shape = 'u8[131072]{0}', space=vmem, size = 0x20000, scoped, tag = 'input window, operand 0']
    #allocation3 [shape = 's32[2]{0}', space=sflag, size = 0x8, scoped, tag = 'scoped memory for tpu_custom_call.1']
    #allocation4 [shape = 's32[2]{0}', space=sflag, size = 0x8, scoped, tag = 'scoped memory for tpu_custom_call.1']
    #allocation5 [shape = 'u8[196608]{0}', space=vmem, size = 0x30000, scoped, tag = 'input window, operand 1, single buffered']
    #allocation6 [shape = 's32[1]{0}', space=sflag, size = 0x4, scoped, tag = 'scoped memory for tpu_custom_call.1']
    #allocation7 [shape = 'u8[196608]{0}', space=vmem, size = 0x30000, scoped, tag = 'input window, operand 2, single buffered']
    #allocation8 [shape = 'u8[131072]{0}', space=vmem, size = 0x20000, scoped, tag = 'output window, operand 0']
    %9 = vsyncpa [#allocation3], 0
    %s10 = scalar_lea.sflag [#allocation3], 1
    %11 = vsyncpa %s10, 0
    %12 = vsyncpa [#allocation6], 0
    %13 = vsyncpa [#allocation4], 0
    %s14 = scalar_lea.sflag [#allocation4], 1
    %15 = vsyncpa %s14, 0
    loop: start=0, step=1, limit=4
    $region2: #{tpu_custom_call.1} parent=1 // loop_pre_header
      _
    $region3: #{tpu_custom_call.1} parent=1 // loop_header
      %s17 = sphi 0, %s21
      %p18 = scmp.ge.s32.totalorder %s17, 4
      %s27 = sphi 0, %s29
      %s30 = sphi 0, %s27
      %s31 = sphi 0, %s30
      %s47 = sphi 0, %s31
      %s51 = sphi 0, %s51
      %s53 = sphi 0, %s51
      %s54 = sphi 0, %s53
      %s68 = sphi 0, %s54
      %s72 = sphi 0, %s72
      %s74 = sphi 0, %s72
      %s75 = sphi 0, %s74
      %s89 = sphi 0, %s75
      %s93 = sphi 0, %s93
      %s95 = sphi 0, %s93
      %s96 = sphi 0, %s95
      %s110 = sphi 0, %s96
      %s116 = sphi 0, %s118
      %s119 = sphi 0, %s116
      %s120 = sphi 0, %s119
      %s136 = sphi 0, %s120
    $region4: #{tpu_custom_call.1} parent=1 // loop_header_branch
      %20 = sbr.rel (%p18) target = $region8
    $region5: #{tpu_custom_call.1} parent=1 // loop_body
      %s22 = ssub.s32 %s17, 1
      %s23 = ssub.s32 %s17, 2
      %s24 = sadd.s32 %s17, 1
      %s25 = ssub.s32 %s17, %s24
      %p26 = scmp.eq.s32.totalorder %s25, 0
      %s28 = sadd.s32 %s27, 1
      %s29 = scalar_select %p26, %s27, %s28
      %p32 = pneg %p26
      %p33 = scmp.eq.s32.totalorder %s17, 1
      %p34 = por %p32, %p33
      %p35 = scmp.ne.s32.totalorder %s27, %s30
      %p36 = scmp.eq.s32.totalorder %s17, 0
      %p37 = por %p35, %p36
      %p38 = scmp.ne.s32.totalorder %s27, %s30
      %p39 = scmp.eq.s32.totalorder %s22, 1
      %p40 = por %p38, %p39
      %p41 = scmp.ne.s32.totalorder %s30, %s31
      %p42 = scmp.eq.s32.totalorder %s22, 0
      %p43 = por %p41, %p42
      %p44 = scmp.ne.s32.totalorder %s30, %s31
      %p45 = scmp.eq.s32.totalorder %s23, 1
      %p46 = por %p44, %p45
      %p48 = scmp.ne.s32.totalorder %s31, %s47
      %p49 = scmp.eq.s32.totalorder %s23, 0
      %p50 = por %p48, %p49
      %s52 = sadd.s32 %s51, 1
      %p55 = scmp.eq.s32.totalorder %s17, 1
      %p56 = scmp.ne.s32.totalorder %s51, %s53
      %p57 = scmp.eq.s32.totalorder %s17, 0
      %p58 = por %p56, %p57
      %p59 = scmp.ne.s32.totalorder %s51, %s53
      %p60 = scmp.eq.s32.totalorder %s22, 1
      %p61 = por %p59, %p60
      %p62 = scmp.ne.s32.totalorder %s53, %s54
      %p63 = scmp.eq.s32.totalorder %s22, 0
      %p64 = por %p62, %p63
      %p65 = scmp.ne.s32.totalorder %s53, %s54
      %p66 = scmp.eq.s32.totalorder %s23, 1
      %p67 = por %p65, %p66
      %p69 = scmp.ne.s32.totalorder %s54, %s68
      %p70 = scmp.eq.s32.totalorder %s23, 0
      %p71 = por %p69, %p70
      %s73 = sadd.s32 %s72, 1
      %p76 = scmp.eq.s32.totalorder %s17, 1
      %p77 = scmp.ne.s32.totalorder %s72, %s74
      %p78 = scmp.eq.s32.totalorder %s17, 0
      %p79 = por %p77, %p78
      %p80 = scmp.ne.s32.totalorder %s72, %s74
      %p81 = scmp.eq.s32.totalorder %s22, 1
      %p82 = por %p80, %p81
      %p83 = scmp.ne.s32.totalorder %s74, %s75
      %p84 = scmp.eq.s32.totalorder %s22, 0
      %p85 = por %p83, %p84
      %p86 = scmp.ne.s32.totalorder %s74, %s75
      %p87 = scmp.eq.s32.totalorder %s23, 1
      %p88 = por %p86, %p87
      %p90 = scmp.ne.s32.totalorder %s75, %s89
      %p91 = scmp.eq.s32.totalorder %s23, 0
      %p92 = por %p90, %p91
      %s94 = sadd.s32 %s93, 1
      %p97 = scmp.eq.s32.totalorder %s17, 1
      %p98 = scmp.ne.s32.totalorder %s93, %s95
      %p99 = scmp.eq.s32.totalorder %s17, 0
      %p100 = por %p98, %p99
      %p101 = scmp.ne.s32.totalorder %s93, %s95
      %p102 = scmp.eq.s32.totalorder %s22, 1
      %p103 = por %p101, %p102
      %p104 = scmp.ne.s32.totalorder %s95, %s96
      %p105 = scmp.eq.s32.totalorder %s22, 0
      %p106 = por %p104, %p105
      %p107 = scmp.ne.s32.totalorder %s95, %s96
      %p108 = scmp.eq.s32.totalorder %s23, 1
      %p109 = por %p107, %p108
      %p111 = scmp.ne.s32.totalorder %s96, %s110
      %p112 = scmp.eq.s32.totalorder %s23, 0
      %p113 = por %p111, %p112
      %s114 = ssub.s32 %s17, %s24
      %p115 = scmp.eq.s32.totalorder %s114, 0
      %s117 = sadd.s32 %s116, 1
      %s118 = scalar_select %p115, %s116, %s117
      %p121 = pneg %p115
      %p122 = scmp.eq.s32.totalorder %s17, 1
      %p123 = por %p121, %p122
      %p124 = scmp.ne.s32.totalorder %s116, %s119
      %p125 = scmp.eq.s32.totalorder %s17, 0
      %p126 = por %p124, %p125
      %p127 = scmp.ne.s32.totalorder %s116, %s119
      %p128 = scmp.eq.s32.totalorder %s22, 1
      %p129 = por %p127, %p128
      %p130 = scmp.ne.s32.totalorder %s119, %s120
      %p131 = scmp.eq.s32.totalorder %s22, 0
      %p132 = por %p130, %p131
      %p133 = scmp.ne.s32.totalorder %s119, %s120
      %p134 = scmp.eq.s32.totalorder %s23, 1
      %p135 = por %p133, %p134
      %p137 = scmp.ne.s32.totalorder %s120, %s136
      %p138 = scmp.eq.s32.totalorder %s23, 0
      %p139 = por %p137, %p138
      %p140 = scmp.le.s32.totalorder 1, %s17
      %p141 = scmp.lt.s32.totalorder %s17, 3
      %p142 = pnand %p140, %p141
      %p143 = pneg %p142
      // Predicated region
      $region9: #{tpu_custom_call.1} parent=5 // pred_check
        _
      $region10: #{tpu_custom_call.1} parent=5 // pred_check_branch
        %145 = sbr.rel (%p142) target = $region12
      $region11: #{tpu_custom_call.1} parent=5 // pred_region
        %s146 = ssub.s32 %s17, 1
        // Predicated region
        $region13: #{tpu_custom_call.1} parent=11 // pred_check
          %p147 = pneg %p64
        $region14: #{tpu_custom_call.1} parent=11 // pred_check_branch
          %149 = sbr.rel (%p147) target = $region16
        $region15: #{tpu_custom_call.1} parent=11 // pred_region
          %s151 = ssub.s32 6144, 6144
          %152 = vsyncadd [#allocation6], %s151
          %s153 = sshll.u32 [#allocation5], 4
          %s154 = int_to_ptr.vmem [resolvable:$true] %s153
          %159 = dma.hbm_to_vmem [thread:$0]  %s1, 6144, %s154, [#allocation6], 128, 128, 8
        $region16: #{tpu_custom_call.1} parent=11 // pred_fallthru
          _
        // Predicated region
        $region17: #{tpu_custom_call.1} parent=11 // pred_check
          %p160 = pneg %p85
        $region18: #{tpu_custom_call.1} parent=11 // pred_check_branch
          %162 = sbr.rel (%p160) target = $region20
        $region19: #{tpu_custom_call.1} parent=11 // pred_region
          %s164 = ssub.s32 6144, 6144
          %165 = vsyncadd [#allocation6], %s164
          %s166 = sshll.u32 [#allocation7], 4
          %s167 = int_to_ptr.vmem [resolvable:$true] %s166
          %172 = dma.hbm_to_vmem [thread:$0]  %s2, 6144, %s167, [#allocation6], 128, 128, 8
        $region20: #{tpu_custom_call.1} parent=11 // pred_fallthru
          _
        // Predicated region
        $region21: #{tpu_custom_call.1} parent=11 // pred_check
          %p173 = pneg %p106
        $region22: #{tpu_custom_call.1} parent=11 // pred_check_branch
          %175 = sbr.rel (%p173) target = $region24
        $region23: #{tpu_custom_call.1} parent=11 // pred_region
          _
        $region24: #{tpu_custom_call.1} parent=11 // pred_fallthru
          _
      $region12: #{tpu_custom_call.1} parent=5 // pred_fallthru
        _
      %p176 = scmp.lt.s32.totalorder %s17, 2
      // Predicated region
      $region25: #{tpu_custom_call.1} parent=5 // pred_check
        %p177 = pneg %p176
      $region26: #{tpu_custom_call.1} parent=5 // pred_check_branch
        %179 = sbr.rel (%p177) target = $region28
      $region27: #{tpu_custom_call.1} parent=5 // pred_region
        // Predicated region
        $region29: #{tpu_custom_call.1} parent=27 // pred_check
          %p180 = pneg %p37
        $region30: #{tpu_custom_call.1} parent=27 // pred_check_branch
          %182 = sbr.rel (%p180) target = $region32
        $region31: #{tpu_custom_call.1} parent=27 // pred_region
          %s183 = sand.u32 %s27, 1
          %s184 = scalar_lea.sflag [#allocation3], %s183
          %s185 = sand.u32 %s27, 1
          %s186 = smul.addr %s185, 128
          %s187 = scalar_lea.vmem [#allocation2], %s186
          %s188 = smul.u32 8, %s17
          %s190 = ssub.s32 2048, 2048
          %191 = vsyncadd %s184, %s190
          %s192 = smul.addr %s188, 2
          %s193 = smul.addr %s192, 128
          %s194 = scalar_lea.hbm %s0, %s193
          %s195 = sshll.u32 %s187, 4
          %s196 = int_to_ptr.vmem [resolvable:$true] %s195
          %201 = dma.hbm_to_vmem [thread:$0]  %s194, 2048, %s196, %s184, 128, 128, 8
        $region32: #{tpu_custom_call.1} parent=27 // pred_fallthru
          _
      $region28: #{tpu_custom_call.1} parent=5 // pred_fallthru
        _
      %p202 = scmp.le.s32.totalorder 1, %s17
      %p203 = scmp.lt.s32.totalorder %s17, 3
      %p204 = pnand %p202, %p203
      %p205 = pneg %p204
      // Predicated region
      $region33: #{tpu_custom_call.1} parent=5 // pred_check
        _
      $region34: #{tpu_custom_call.1} parent=5 // pred_check_branch
        %207 = sbr.rel (%p204) target = $region36
      $region35: #{tpu_custom_call.1} parent=5 // pred_region
        %s208 = ssub.s32 %s17, 1
        %s209 = sand.u32 %s30, 1
        %s210 = scalar_lea.sflag [#allocation3], %s209
        %s211 = sand.u32 %s30, 1
        %s212 = smul.addr %s211, 128
        %s213 = scalar_lea.vmem [#allocation2], %s212
        // Predicated region
        $region37: #{tpu_custom_call.1} parent=35 // pred_check
          %p214 = pneg %p43
        $region38: #{tpu_custom_call.1} parent=35 // pred_check_branch
          %216 = sbr.rel (%p214) target = $region40
        $region39: #{tpu_custom_call.1} parent=35 // pred_region
          %217 = dma.done %s210, 2048
        $region40: #{tpu_custom_call.1} parent=35 // pred_fallthru
          _
        // Predicated region
        $region41: #{tpu_custom_call.1} parent=35 // pred_check
          %p218 = pneg %p64
        $region42: #{tpu_custom_call.1} parent=35 // pred_check_branch
          %220 = sbr.rel (%p218) target = $region44
        $region43: #{tpu_custom_call.1} parent=35 // pred_region
          %221 = dma.done [#allocation6], 6144
        $region44: #{tpu_custom_call.1} parent=35 // pred_fallthru
          _
        // Predicated region
        $region45: #{tpu_custom_call.1} parent=35 // pred_check
          %p222 = pneg %p85
        $region46: #{tpu_custom_call.1} parent=35 // pred_check_branch
          %224 = sbr.rel (%p222) target = $region48
        $region47: #{tpu_custom_call.1} parent=35 // pred_region
          %225 = dma.done [#allocation6], 6144
        $region48: #{tpu_custom_call.1} parent=35 // pred_fallthru
          _
        %s226 = sand.u32 %s30, 1
        %s227 = scalar_lea.sflag [#allocation3], %s226
        %s228 = sand.u32 %s30, 1
        %s229 = smul.addr %s228, 128
        %s230 = scalar_lea.vmem [#allocation2], %s229
        %p231 = pneg %p43
        %p232 = pneg %p40
        %p233 = pneg %p64
        %p234 = pneg %p61
        %p235 = pneg %p85
        %p236 = pneg %p82
        %p237 = pneg %p106
        %p238 = pneg %p103
        %p239 = pneg %p132
        %p240 = pneg %p129
        %s241 = sand.u32 %s119, 1
        %s242 = scalar_lea.sflag [#allocation4], %s241
        %s243 = sand.u32 %s119, 1
        %s244 = smul.addr %s243, 128
        %s245 = scalar_lea.vmem [#allocation8], %s244
        %s246 = smul.u32 8, %s22
        %s247 = smul.u32 8, %s22
        %v248 = vld [vmem:[%s213] sm:$0xff]
        %v249 = vld [vmem:[%s213 + $0x8] sm:$0xff]
        %v250 = vld [vmem:[%s213 + $0x10] sm:$0xff]
        %v251 = vld [vmem:[%s213 + $0x18] sm:$0xff]
        %v252 = vld [vmem:[%s213 + $0x20] sm:$0xff]
        %v253 = vld [vmem:[%s213 + $0x28] sm:$0xff]
        %v254 = vld [vmem:[%s213 + $0x30] sm:$0xff]
        %v255 = vld [vmem:[%s213 + $0x38] sm:$0xff]
        %v256 = vld [vmem:[%s213 + $0x40] sm:$0xff]
        %v257 = vld [vmem:[%s213 + $0x48] sm:$0xff]
        %v258 = vld [vmem:[%s213 + $0x50] sm:$0xff]
        %v259 = vld [vmem:[%s213 + $0x58] sm:$0xff]
        %v260 = vld [vmem:[%s213 + $0x60] sm:$0xff]
        %v261 = vld [vmem:[%s213 + $0x68] sm:$0xff]
        %v262 = vld [vmem:[%s213 + $0x70] sm:$0xff]
        %v263 = vld [vmem:[%s213 + $0x78] sm:$0xff]
        %vm280 = vcmask 1040384
        %v281 = vrot.slane %v248, 7
        %v282 = vrot.slane %v249, 7
        %v283 = vsel %vm280, %v281, %v282
        %v284 = vrot.slane %v250, 7
        %v285 = vrot.slane %v251, 7
        %v286 = vsel %vm280, %v284, %v285
        %v287 = vrot.slane %v252, 7
        %v288 = vrot.slane %v253, 7
        %v289 = vsel %vm280, %v287, %v288
        %v290 = vrot.slane %v254, 7
        %v291 = vrot.slane %v255, 7
        %v292 = vsel %vm280, %v290, %v291
        %v293 = vrot.slane %v256, 7
        %v294 = vrot.slane %v257, 7
        %v295 = vsel %vm280, %v293, %v294
        %v296 = vrot.slane %v258, 7
        %v297 = vrot.slane %v259, 7
        %v298 = vsel %vm280, %v296, %v297
        %v299 = vrot.slane %v260, 7
        %v300 = vrot.slane %v261, 7
        %v301 = vsel %vm280, %v299, %v300
        %v302 = vrot.slane %v262, 7
        %v303 = vrot.slane %v263, 7
        %v304 = vsel %vm280, %v302, %v303
        %v321 = vsel %vm280, 0.0, %v281
        %v322 = vsel %vm280, 0.0, %v284
        %v323 = vsel %vm280, 0.0, %v287
        %v324 = vsel %vm280, 0.0, %v290
        %v325 = vsel %vm280, 0.0, %v293
        %v326 = vsel %vm280, 0.0, %v296
        %v327 = vsel %vm280, 0.0, %v299
        %v328 = vsel %vm280, 0.0, %v302
        %vm329 = vcmask 1046528
        %v330 = vrot.slane %v248, 1
        %v331 = vrot.slane %v249, 1
        %v332 = vsel %vm329, %v330, %v331
        %v333 = vrot.slane %v250, 1
        %v334 = vrot.slane %v251, 1
        %v335 = vsel %vm329, %v333, %v334
        %v336 = vrot.slane %v252, 1
        %v337 = vrot.slane %v253, 1
        %v338 = vsel %vm329, %v336, %v337
        %v339 = vrot.slane %v254, 1
        %v340 = vrot.slane %v255, 1
        %v341 = vsel %vm329, %v339, %v340
        %v342 = vrot.slane %v256, 1
        %v343 = vrot.slane %v257, 1
        %v344 = vsel %vm329, %v342, %v343
        %v345 = vrot.slane %v258, 1
        %v346 = vrot.slane %v259, 1
        %v347 = vsel %vm329, %v345, %v346
        %v348 = vrot.slane %v260, 1
        %v349 = vrot.slane %v261, 1
        %v350 = vsel %vm329, %v348, %v349
        %v351 = vrot.slane %v262, 1
        %v352 = vrot.slane %v263, 1
        %v353 = vsel %vm329, %v351, %v352
        %v370 = vsel %vm329, %v331, 0.0
        %v371 = vsel %vm329, %v334, 0.0
        %v372 = vsel %vm329, %v337, 0.0
        %v373 = vsel %vm329, %v340, 0.0
        %v374 = vsel %vm329, %v343, 0.0
        %v375 = vsel %vm329, %v346, 0.0
        %v376 = vsel %vm329, %v349, 0.0
        %v377 = vsel %vm329, %v352, 0.0
        %v378 = vld [vmem:[#allocation5] sm:$0xff]
        %v379 = vld [vmem:[#allocation5 + $0x8] sm:$0xff]
        %v380 = vld [vmem:[#allocation5 + $0x10] sm:$0xff]
        %v381 = vld [vmem:[#allocation5 + $0x18] sm:$0xff]
        %v382 = vld [vmem:[#allocation5 + $0x20] sm:$0xff]
        %v383 = vld [vmem:[#allocation5 + $0x28] sm:$0xff]
        %v384 = vld [vmem:[#allocation5 + $0x30] sm:$0xff]
        %v385 = vld [vmem:[#allocation5 + $0x38] sm:$0xff]
        %v386 = vld [vmem:[#allocation5 + $0x40] sm:$0xff]
        %v387 = vld [vmem:[#allocation5 + $0x48] sm:$0xff]
        %v388 = vld [vmem:[#allocation5 + $0x50] sm:$0xff]
        %v389 = vld [vmem:[#allocation5 + $0x58] sm:$0xff]
        %v390 = vld [vmem:[#allocation5 + $0x60] sm:$0xff]
        %v391 = vld [vmem:[#allocation5 + $0x68] sm:$0xff]
        %v392 = vld [vmem:[#allocation5 + $0x70] sm:$0xff]
        %v393 = vld [vmem:[#allocation5 + $0x78] sm:$0xff]
        %v394 = vld [vmem:[#allocation5 + $0x80] sm:$0xff]
        %v395 = vld [vmem:[#allocation5 + $0x88] sm:$0xff]
        %v396 = vld [vmem:[#allocation5 + $0x90] sm:$0xff]
        %v397 = vld [vmem:[#allocation5 + $0x98] sm:$0xff]
        %v398 = vld [vmem:[#allocation5 + $0xa0] sm:$0xff]
        %v399 = vld [vmem:[#allocation5 + $0xa8] sm:$0xff]
        %v400 = vld [vmem:[#allocation5 + $0xb0] sm:$0xff]
        %v401 = vld [vmem:[#allocation5 + $0xb8] sm:$0xff]
        %v402 = vld [vmem:[#allocation5 + $0xc0] sm:$0xff]
        %v403 = vld [vmem:[#allocation5 + $0xc8] sm:$0xff]
        %v404 = vld [vmem:[#allocation5 + $0xd0] sm:$0xff]
        %v405 = vld [vmem:[#allocation5 + $0xd8] sm:$0xff]
        %v406 = vld [vmem:[#allocation5 + $0xe0] sm:$0xff]
        %v407 = vld [vmem:[#allocation5 + $0xe8] sm:$0xff]
        %v408 = vld [vmem:[#allocation5 + $0xf0] sm:$0xff]
        %v409 = vld [vmem:[#allocation5 + $0xf8] sm:$0xff]
        %410 = vmatprep.subr.mxu0 0.0
        %411 = vmatpush1.msra.mxu0 %v394
        %412 = vmatprep.subr.mxu0 0.0
        %413 = vmatpush1.msra.mxu0 %v395
        %414 = vmatprep.subr.mxu0 0.0
        %415 = vmatpush1.msra.mxu0 %v396
        %416 = vmatprep.subr.mxu0 0.0
        %417 = vmatpush1.msra.mxu0 %v397
        %418 = vmatprep.subr.mxu0 0.0
        %419 = vmatpush1.msra.mxu0 %v398
        %420 = vmatprep.subr.mxu0 0.0
        %421 = vmatpush1.msra.mxu0 %v399
        %422 = vmatprep.subr.mxu0 0.0
        %423 = vmatpush1.msra.mxu0 %v400
        %424 = vmatprep.subr.mxu0 0.0
        %425 = vmatpush1.msra.mxu0 %v401
        %426 = vmatprep.subr.mxu0 0.0
        %427 = vmatpush1.msra.mxu0 %v402
        %428 = vmatprep.subr.mxu0 0.0
        %429 = vmatpush1.msra.mxu0 %v403
        %430 = vmatprep.subr.mxu0 0.0
        %431 = vmatpush1.msra.mxu0 %v404
        %432 = vmatprep.subr.mxu0 0.0
        %433 = vmatpush1.msra.mxu0 %v405
        %434 = vmatprep.subr.mxu0 0.0
        %435 = vmatpush1.msra.mxu0 %v406
        %436 = vmatprep.subr.mxu0 0.0
        %437 = vmatpush1.msra.mxu0 %v407
        %438 = vmatprep.subr.mxu0 0.0
        %439 = vmatpush1.msra.mxu0 %v408
        %440 = vmatprep.subr.mxu0 0.0
        %441 = vmatpush1.msra.mxu0 %v409
        %442 = vmatprep.subr.mxu0 0.0
        %443 = vmatpush1.msra.mxu0 0.0
        %444 = vmatprep.subr.mxu0 0.0
        %445 = vmatpush1.msra.mxu0 0.0
        %446 = vmatprep.subr.mxu0 0.0
        %447 = vmatpush1.msra.mxu0 0.0
        %448 = vmatprep.subr.mxu0 0.0
        %449 = vmatpush1.msra.mxu0 0.0
        %450 = vmatprep.subr.mxu0 0.0
        %451 = vmatpush1.msra.mxu0 0.0
        %452 = vmatprep.subr.mxu0 0.0
        %453 = vmatpush1.msra.mxu0 0.0
        %454 = vmatprep.subr.mxu0 0.0
        %455 = vmatpush1.msra.mxu0 0.0
        %456 = vmatprep.subr.mxu0 0.0
        %457 = vmatpush1.msra.mxu0 0.0
        %458 = vmatprep.subr.mxu0 0.0
        %459 = vmatpush1.msra.mxu0 0.0
        %460 = vmatprep.subr.mxu0 0.0
        %461 = vmatpush1.msra.mxu0 0.0
        %462 = vmatprep.subr.mxu0 0.0
        %463 = vmatpush1.msra.mxu0 0.0
        %464 = vmatprep.subr.mxu0 0.0
        %465 = vmatpush1.msra.mxu0 0.0
        %466 = vmatprep.subr.mxu0 0.0
        %467 = vmatpush1.msra.mxu0 0.0
        %468 = vmatprep.subr.mxu0 0.0
        %469 = vmatpush1.msra.mxu0 0.0
        %470 = vmatprep.subr.mxu0 0.0
        %471 = vmatpush1.msra.mxu0 0.0
        %472 = vmatprep.subr.mxu0 0.0
        %473 = vmatpush1.msra.mxu0 0.0
        %474 = vmatprep.mubr.f32.mxu0 0.0
        %475 = vmatmul.mubr.f32.gmra.mrb[0].mxu0 %v248
        %v476 = vpop.f32.mrb[0].mxu0
        %v477 = vadd.f32 0.0, %v476
        %v478 = vpop.f32.mrb[0].mxu0
        %479 = vmatprep.mubr.f32.mxu0 0.0
        %480 = vmatmul.mubr.f32.gmra.mrb[0].mxu0 %v249
        %v481 = vpop.f32.mrb[0].mxu0
        %v482 = vadd.f32 0.0, %v481
        %v483 = vpop.f32.mrb[0].mxu0
        %484 = vmatprep.mubr.f32.mxu0 0.0
        %485 = vmatmul.mubr.f32.gmra.mrb[0].mxu0 %v250
        %v486 = vpop.f32.mrb[0].mxu0
        %v487 = vadd.f32 0.0, %v486
        %v488 = vpop.f32.mrb[0].mxu0
        %489 = vmatprep.mubr.f32.mxu0 0.0
        %490 = vmatmul.mubr.f32.gmra.mrb[0].mxu0 %v251
        %v491 = vpop.f32.mrb[0].mxu0
        %v492 = vadd.f32 0.0, %v491
        %v493 = vpop.f32.mrb[0].mxu0
        %494 = vmatprep.mubr.f32.mxu0 0.0
        %495 = vmatmul.mubr.f32.gmra.mrb[0].mxu0 %v252
        %v496 = vpop.f32.mrb[0].mxu0
        %v497 = vadd.f32 0.0, %v496
        %v498 = vpop.f32.mrb[0].mxu0
        %499 = vmatprep.mubr.f32.mxu0 0.0
        %500 = vmatmul.mubr.f32.gmra.mrb[0].mxu0 %v253
        %v501 = vpop.f32.mrb[0].mxu0
        %v502 = vadd.f32 0.0, %v501
        %v503 = vpop.f32.mrb[0].mxu0
        %504 = vmatprep.mubr.f32.mxu0 0.0
        %505 = vmatmul.mubr.f32.gmra.mrb[0].mxu0 %v254
        %v506 = vpop.f32.mrb[0].mxu0
        %v507 = vadd.f32 0.0, %v506
        %v508 = vpop.f32.mrb[0].mxu0
        %509 = vmatprep.mubr.f32.mxu0 0.0
        %510 = vmatmul.mubr.f32.gmra.mrb[0].mxu0 %v255
        %v511 = vpop.f32.mrb[0].mxu0
        %v512 = vadd.f32 0.0, %v511
        %v513 = vpop.f32.mrb[0].mxu0
        %514 = vmatprep.mubr.f32.mxu0 0.0
        %515 = vmatmul.mubr.f32.gmra.mrb[0].mxu0 %v256
        %v516 = vpop.f32.mrb[0].mxu0
        %v517 = vadd.f32 0.0, %v516
        %v518 = vpop.f32.mrb[0].mxu0
        %519 = vmatprep.mubr.f32.mxu0 0.0
        %520 = vmatmul.mubr.f32.gmra.mrb[0].mxu0 %v257
        %v521 = vpop.f32.mrb[0].mxu0
        %v522 = vadd.f32 0.0, %v521
        %v523 = vpop.f32.mrb[0].mxu0
        %524 = vmatprep.mubr.f32.mxu0 0.0
        %525 = vmatmul.mubr.f32.gmra.mrb[0].mxu0 %v258
        %v526 = vpop.f32.mrb[0].mxu0
        %v527 = vadd.f32 0.0, %v526
        %v528 = vpop.f32.mrb[0].mxu0
        %529 = vmatprep.mubr.f32.mxu0 0.0
        %530 = vmatmul.mubr.f32.gmra.mrb[0].mxu0 %v259
        %v531 = vpop.f32.mrb[0].mxu0
        %v532 = vadd.f32 0.0, %v531
        %v533 = vpop.f32.mrb[0].mxu0
        %534 = vmatprep.mubr.f32.mxu0 0.0
        %535 = vmatmul.mubr.f32.gmra.mrb[0].mxu0 %v260
        %v536 = vpop.f32.mrb[0].mxu0
        %v537 = vadd.f32 0.0, %v536
        %v538 = vpop.f32.mrb[0].mxu0
        %539 = vmatprep.mubr.f32.mxu0 0.0
        %540 = vmatmul.mubr.f32.gmra.mrb[0].mxu0 %v261
        %v541 = vpop.f32.mrb[0].mxu0
        %v542 = vadd.f32 0.0, %v541
        %v543 = vpop.f32.mrb[0].mxu0
        %544 = vmatprep.mubr.f32.mxu0 0.0
        %545 = vmatmul.mubr.f32.gmra.mrb[0].mxu0 %v262
        %v546 = vpop.f32.mrb[0].mxu0
        %v547 = vadd.f32 0.0, %v546
        %v548 = vpop.f32.mrb[0].mxu0
        %549 = vmatprep.mubr.f32.mxu0 0.0
        %550 = vmatmul.mubr.f32.gmra.mrb[0].mxu0 %v263
        %v551 = vpop.f32.mrb[0].mxu0
        %v552 = vadd.f32 0.0, %v551
        %v553 = vpop.f32.mrb[0].mxu0
        %554 = vdwg.mxu0
        %555 = vmatprep.subr.mxu0 0.0
        %556 = vmatpush1.msra.mxu0 %v378
        %557 = vmatprep.subr.mxu0 0.0
        %558 = vmatpush1.msra.mxu0 %v379
        %559 = vmatprep.subr.mxu0 0.0
        %560 = vmatpush1.msra.mxu0 %v380
        %561 = vmatprep.subr.mxu0 0.0
        %562 = vmatpush1.msra.mxu0 %v381
        %563 = vmatprep.subr.mxu0 0.0
        %564 = vmatpush1.msra.mxu0 %v382
        %565 = vmatprep.subr.mxu0 0.0
        %566 = vmatpush1.msra.mxu0 %v383
        %567 = vmatprep.subr.mxu0 0.0
        %568 = vmatpush1.msra.mxu0 %v384
        %569 = vmatprep.subr.mxu0 0.0
        %570 = vmatpush1.msra.mxu0 %v385
        %571 = vmatprep.subr.mxu0 0.0
        %572 = vmatpush1.msra.mxu0 %v386
        %573 = vmatprep.subr.mxu0 0.0
        %574 = vmatpush1.msra.mxu0 %v387
        %575 = vmatprep.subr.mxu0 0.0
        %576 = vmatpush1.msra.mxu0 %v388
        %577 = vmatprep.subr.mxu0 0.0
        %578 = vmatpush1.msra.mxu0 %v389
        %579 = vmatprep.subr.mxu0 0.0
        %580 = vmatpush1.msra.mxu0 %v390
        %581 = vmatprep.subr.mxu0 0.0
        %582 = vmatpush1.msra.mxu0 %v391
        %583 = vmatprep.subr.mxu0 0.0
        %584 = vmatpush1.msra.mxu0 %v392
        %585 = vmatprep.subr.mxu0 0.0
        %586 = vmatpush1.msra.mxu0 %v393
        %587 = vmatprep.subr.mxu0 0.0
        %588 = vmatpush1.msra.mxu0 0.0
        %589 = vmatprep.subr.mxu0 0.0
        %590 = vmatpush1.msra.mxu0 0.0
        %591 = vmatprep.subr.mxu0 0.0
        %592 = vmatpush1.msra.mxu0 0.0
        %593 = vmatprep.subr.mxu0 0.0
        %594 = vmatpush1.msra.mxu0 0.0
        %595 = vmatprep.subr.mxu0 0.0
        %596 = vmatpush1.msra.mxu0 0.0
        %597 = vmatprep.subr.mxu0 0.0
        %598 = vmatpush1.msra.mxu0 0.0
        %599 = vmatprep.subr.mxu0 0.0
        %600 = vmatpush1.msra.mxu0 0.0
        %601 = vmatprep.subr.mxu0 0.0
        %602 = vmatpush1.msra.mxu0 0.0
        %603 = vmatprep.subr.mxu0 0.0
        %604 = vmatpush1.msra.mxu0 0.0
        %605 = vmatprep.subr.mxu0 0.0
        %606 = vmatpush1.msra.mxu0 0.0
        %607 = vmatprep.subr.mxu0 0.0
        %608 = vmatpush1.msra.mxu0 0.0
        %609 = vmatprep.subr.mxu0 0.0
        %610 = vmatpush1.msra.mxu0 0.0
        %611 = vmatprep.subr.mxu0 0.0
        %612 = vmatpush1.msra.mxu0 0.0
        %613 = vmatprep.subr.mxu0 0.0
        %614 = vmatpush1.msra.mxu0 0.0
        %615 = vmatprep.subr.mxu0 0.0
        %616 = vmatpush1.msra.mxu0 0.0
        %617 = vmatprep.subr.mxu0 0.0
        %618 = vmatpush1.msra.mxu0 0.0
        %619 = vmatprep.mubr.f32.mxu0 0.0
        %620 = vmatmul.mubr.f32.gmra.mrb[0].mxu0 %v321
        %v621 = vpop.f32.mrb[0].mxu0
        %v622 = vadd.f32 %v477, %v621
        %v623 = vpop.f32.mrb[0].mxu0
        %624 = vmatprep.mubr.f32.mxu0 0.0
        %625 = vmatmul.mubr.f32.gmra.mrb[0].mxu0 %v283
        %v626 = vpop.f32.mrb[0].mxu0
        %v627 = vadd.f32 %v482, %v626
        %v628 = vpop.f32.mrb[0].mxu0
        %629 = vmatprep.mubr.f32.mxu0 0.0
        %630 = vmatmul.mubr.f32.gmra.mrb[0].mxu0 %v322
        %v631 = vpop.f32.mrb[0].mxu0
        %v632 = vadd.f32 %v487, %v631
        %v633 = vpop.f32.mrb[0].mxu0
        %634 = vmatprep.mubr.f32.mxu0 0.0
        %635 = vmatmul.mubr.f32.gmra.mrb[0].mxu0 %v286
        %v636 = vpop.f32.mrb[0].mxu0
        %v637 = vadd.f32 %v492, %v636
        %v638 = vpop.f32.mrb[0].mxu0
        %639 = vmatprep.mubr.f32.mxu0 0.0
        %640 = vmatmul.mubr.f32.gmra.mrb[0].mxu0 %v323
        %v641 = vpop.f32.mrb[0].mxu0
        %v642 = vadd.f32 %v497, %v641
        %v643 = vpop.f32.mrb[0].mxu0
        %644 = vmatprep.mubr.f32.mxu0 0.0
        %645 = vmatmul.mubr.f32.gmra.mrb[0].mxu0 %v289
        %v646 = vpop.f32.mrb[0].mxu0
        %v647 = vadd.f32 %v502, %v646
        %v648 = vpop.f32.mrb[0].mxu0
        %649 = vmatprep.mubr.f32.mxu0 0.0
        %650 = vmatmul.mubr.f32.gmra.mrb[0].mxu0 %v324
        %v651 = vpop.f32.mrb[0].mxu0
        %v652 = vadd.f32 %v507, %v651
        %v653 = vpop.f32.mrb[0].mxu0
        %654 = vmatprep.mubr.f32.mxu0 0.0
        %655 = vmatmul.mubr.f32.gmra.mrb[0].mxu0 %v292
        %v656 = vpop.f32.mrb[0].mxu0
        %v657 = vadd.f32 %v512, %v656
        %v658 = vpop.f32.mrb[0].mxu0
        %659 = vmatprep.mubr.f32.mxu0 0.0
        %660 = vmatmul.mubr.f32.gmra.mrb[0].mxu0 %v325
        %v661 = vpop.f32.mrb[0].mxu0
        %v662 = vadd.f32 %v517, %v661
        %v663 = vpop.f32.mrb[0].mxu0
        %664 = vmatprep.mubr.f32.mxu0 0.0
        %665 = vmatmul.mubr.f32.gmra.mrb[0].mxu0 %v295
        %v666 = vpop.f32.mrb[0].mxu0
        %v667 = vadd.f32 %v522, %v666
        %v668 = vpop.f32.mrb[0].mxu0
        %669 = vmatprep.mubr.f32.mxu0 0.0
        %670 = vmatmul.mubr.f32.gmra.mrb[0].mxu0 %v326
        %v671 = vpop.f32.mrb[0].mxu0
        %v672 = vadd.f32 %v527, %v671
        %v673 = vpop.f32.mrb[0].mxu0
        %674 = vmatprep.mubr.f32.mxu0 0.0
        %675 = vmatmul.mubr.f32.gmra.mrb[0].mxu0 %v298
        %v676 = vpop.f32.mrb[0].mxu0
        %v677 = vadd.f32 %v532, %v676
        %v678 = vpop.f32.mrb[0].mxu0
        %679 = vmatprep.mubr.f32.mxu0 0.0
        %680 = vmatmul.mubr.f32.gmra.mrb[0].mxu0 %v327
        %v681 = vpop.f32.mrb[0].mxu0
        %v682 = vadd.f32 %v537, %v681
        %v683 = vpop.f32.mrb[0].mxu0
        %684 = vmatprep.mubr.f32.mxu0 0.0
        %685 = vmatmul.mubr.f32.gmra.mrb[0].mxu0 %v301
        %v686 = vpop.f32.mrb[0].mxu0
        %v687 = vadd.f32 %v542, %v686
        %v688 = vpop.f32.mrb[0].mxu0
        %689 = vmatprep.mubr.f32.mxu0 0.0
        %690 = vmatmul.mubr.f32.gmra.mrb[0].mxu0 %v328
        %v691 = vpop.f32.mrb[0].mxu0
        %v692 = vadd.f32 %v547, %v691
        %v693 = vpop.f32.mrb[0].mxu0
        %694 = vmatprep.mubr.f32.mxu0 0.0
        %695 = vmatmul.mubr.f32.gmra.mrb[0].mxu0 %v304
        %v696 = vpop.f32.mrb[0].mxu0
        %v697 = vadd.f32 %v552, %v696
        %v698 = vpop.f32.mrb[0].mxu0
        %699 = vdwg.mxu0
        %v700 = vld [vmem:[#allocation5 + $0x100] sm:$0xff]
        %v701 = vld [vmem:[#allocation5 + $0x108] sm:$0xff]
        %v702 = vld [vmem:[#allocation5 + $0x110] sm:$0xff]
        %v703 = vld [vmem:[#allocation5 + $0x118] sm:$0xff]
        %v704 = vld [vmem:[#allocation5 + $0x120] sm:$0xff]
        %v705 = vld [vmem:[#allocation5 + $0x128] sm:$0xff]
        %v706 = vld [vmem:[#allocation5 + $0x130] sm:$0xff]
        %v707 = vld [vmem:[#allocation5 + $0x138] sm:$0xff]
        %v708 = vld [vmem:[#allocation5 + $0x140] sm:$0xff]
        %v709 = vld [vmem:[#allocation5 + $0x148] sm:$0xff]
        %v710 = vld [vmem:[#allocation5 + $0x150] sm:$0xff]
        %v711 = vld [vmem:[#allocation5 + $0x158] sm:$0xff]
        %v712 = vld [vmem:[#allocation5 + $0x160] sm:$0xff]
        %v713 = vld [vmem:[#allocation5 + $0x168] sm:$0xff]
        %v714 = vld [vmem:[#allocation5 + $0x170] sm:$0xff]
        %v715 = vld [vmem:[#allocation5 + $0x178] sm:$0xff]
        %716 = vmatprep.subr.mxu0 0.0
        %717 = vmatpush1.msra.mxu0 %v700
        %718 = vmatprep.subr.mxu0 0.0
        %719 = vmatpush1.msra.mxu0 %v701
        %720 = vmatprep.subr.mxu0 0.0
        %721 = vmatpush1.msra.mxu0 %v702
        %722 = vmatprep.subr.mxu0 0.0
        %723 = vmatpush1.msra.mxu0 %v703
        %724 = vmatprep.subr.mxu0 0.0
        %725 = vmatpush1.msra.mxu0 %v704
        %726 = vmatprep.subr.mxu0 0.0
        %727 = vmatpush1.msra.mxu0 %v705
        %728 = vmatprep.subr.mxu0 0.0
        %729 = vmatpush1.msra.mxu0 %v706
        %730 = vmatprep.subr.mxu0 0.0
        %731 = vmatpush1.msra.mxu0 %v707
        %732 = vmatprep.subr.mxu0 0.0
        %733 = vmatpush1.msra.mxu0 %v708
        %734 = vmatprep.subr.mxu0 0.0
        %735 = vmatpush1.msra.mxu0 %v709
        %736 = vmatprep.subr.mxu0 0.0
        %737 = vmatpush1.msra.mxu0 %v710
        %738 = vmatprep.subr.mxu0 0.0
        %739 = vmatpush1.msra.mxu0 %v711
        %740 = vmatprep.subr.mxu0 0.0
        %741 = vmatpush1.msra.mxu0 %v712
        %742 = vmatprep.subr.mxu0 0.0
        %743 = vmatpush1.msra.mxu0 %v713
        %744 = vmatprep.subr.mxu0 0.0
        %745 = vmatpush1.msra.mxu0 %v714
        %746 = vmatprep.subr.mxu0 0.0
        %747 = vmatpush1.msra.mxu0 %v715
        %748 = vmatprep.subr.mxu0 0.0
        %749 = vmatpush1.msra.mxu0 0.0
        %750 = vmatprep.subr.mxu0 0.0
        %751 = vmatpush1.msra.mxu0 0.0
        %752 = vmatprep.subr.mxu0 0.0
        %753 = vmatpush1.msra.mxu0 0.0
        %754 = vmatprep.subr.mxu0 0.0
        %755 = vmatpush1.msra.mxu0 0.0
        %756 = vmatprep.subr.mxu0 0.0
        %757 = vmatpush1.msra.mxu0 0.0
        %758 = vmatprep.subr.mxu0 0.0
        %759 = vmatpush1.msra.mxu0 0.0
        %760 = vmatprep.subr.mxu0 0.0
        %761 = vmatpush1.msra.mxu0 0.0
        %762 = vmatprep.subr.mxu0 0.0
        %763 = vmatpush1.msra.mxu0 0.0
        %764 = vmatprep.subr.mxu0 0.0
        %765 = vmatpush1.msra.mxu0 0.0
        %766 = vmatprep.subr.mxu0 0.0
        %767 = vmatpush1.msra.mxu0 0.0
        %768 = vmatprep.subr.mxu0 0.0
        %769 = vmatpush1.msra.mxu0 0.0
        %770 = vmatprep.subr.mxu0 0.0
        %771 = vmatpush1.msra.mxu0 0.0
        %772 = vmatprep.subr.mxu0 0.0
        %773 = vmatpush1.msra.mxu0 0.0
        %774 = vmatprep.subr.mxu0 0.0
        %775 = vmatpush1.msra.mxu0 0.0
        %776 = vmatprep.subr.mxu0 0.0
        %777 = vmatpush1.msra.mxu0 0.0
        %778 = vmatprep.subr.mxu0 0.0
        %779 = vmatpush1.msra.mxu0 0.0
        %780 = vmatprep.mubr.f32.mxu0 0.0
        %781 = vmatmul.mubr.f32.gmra.mrb[0].mxu0 %v332
        %v782 = vpop.f32.mrb[0].mxu0
        %v783 = vadd.f32 0.0, %v782
        %v784 = vpop.f32.mrb[0].mxu0
        %785 = vmatprep.mubr.f32.mxu0 0.0
        %786 = vmatmul.mubr.f32.gmra.mrb[0].mxu0 %v370
        %v787 = vpop.f32.mrb[0].mxu0
        %v788 = vadd.f32 0.0, %v787
        %v789 = vpop.f32.mrb[0].mxu0
        %790 = vmatprep.mubr.f32.mxu0 0.0
        %791 = vmatmul.mubr.f32.gmra.mrb[0].mxu0 %v335
        %v792 = vpop.f32.mrb[0].mxu0
        %v793 = vadd.f32 0.0, %v792
        %v794 = vpop.f32.mrb[0].mxu0
        %795 = vmatprep.mubr.f32.mxu0 0.0
        %796 = vmatmul.mubr.f32.gmra.mrb[0].mxu0 %v371
        %v797 = vpop.f32.mrb[0].mxu0
        %v798 = vadd.f32 0.0, %v797
        %v799 = vpop.f32.mrb[0].mxu0
        %800 = vmatprep.mubr.f32.mxu0 0.0
        %801 = vmatmul.mubr.f32.gmra.mrb[0].mxu0 %v338
        %v802 = vpop.f32.mrb[0].mxu0
        %v803 = vadd.f32 0.0, %v802
        %v804 = vpop.f32.mrb[0].mxu0
        %805 = vmatprep.mubr.f32.mxu0 0.0
        %806 = vmatmul.mubr.f32.gmra.mrb[0].mxu0 %v372
        %v807 = vpop.f32.mrb[0].mxu0
        %v808 = vadd.f32 0.0, %v807
        %v809 = vpop.f32.mrb[0].mxu0
        %810 = vmatprep.mubr.f32.mxu0 0.0
        %811 = vmatmul.mubr.f32.gmra.mrb[0].mxu0 %v341
        %v812 = vpop.f32.mrb[0].mxu0
        %v813 = vadd.f32 0.0, %v812
        %v814 = vpop.f32.mrb[0].mxu0
        %815 = vmatprep.mubr.f32.mxu0 0.0
        %816 = vmatmul.mubr.f32.gmra.mrb[0].mxu0 %v373
        %v817 = vpop.f32.mrb[0].mxu0
        %v818 = vadd.f32 0.0, %v817
        %v819 = vpop.f32.mrb[0].mxu0
        %820 = vmatprep.mubr.f32.mxu0 0.0
        %821 = vmatmul.mubr.f32.gmra.mrb[0].mxu0 %v344
        %v822 = vpop.f32.mrb[0].mxu0
        %v823 = vadd.f32 0.0, %v822
        %v824 = vpop.f32.mrb[0].mxu0
        %825 = vmatprep.mubr.f32.mxu0 0.0
        %826 = vmatmul.mubr.f32.gmra.mrb[0].mxu0 %v374
        %v827 = vpop.f32.mrb[0].mxu0
        %v828 = vadd.f32 0.0, %v827
        %v829 = vpop.f32.mrb[0].mxu0
        %830 = vmatprep.mubr.f32.mxu0 0.0
        %831 = vmatmul.mubr.f32.gmra.mrb[0].mxu0 %v347
        %v832 = vpop.f32.mrb[0].mxu0
        %v833 = vadd.f32 0.0, %v832
        %v834 = vpop.f32.mrb[0].mxu0
        %835 = vmatprep.mubr.f32.mxu0 0.0
        %836 = vmatmul.mubr.f32.gmra.mrb[0].mxu0 %v375
        %v837 = vpop.f32.mrb[0].mxu0
        %v838 = vadd.f32 0.0, %v837
        %v839 = vpop.f32.mrb[0].mxu0
        %840 = vmatprep.mubr.f32.mxu0 0.0
        %841 = vmatmul.mubr.f32.gmra.mrb[0].mxu0 %v350
        %v842 = vpop.f32.mrb[0].mxu0
        %v843 = vadd.f32 0.0, %v842
        %v844 = vpop.f32.mrb[0].mxu0
        %845 = vmatprep.mubr.f32.mxu0 0.0
        %846 = vmatmul.mubr.f32.gmra.mrb[0].mxu0 %v376
        %v847 = vpop.f32.mrb[0].mxu0
        %v848 = vadd.f32 0.0, %v847
        %v849 = vpop.f32.mrb[0].mxu0
        %850 = vmatprep.mubr.f32.mxu0 0.0
        %851 = vmatmul.mubr.f32.gmra.mrb[0].mxu0 %v353
        %v852 = vpop.f32.mrb[0].mxu0
        %v853 = vadd.f32 0.0, %v852
        %v854 = vpop.f32.mrb[0].mxu0
        %855 = vmatprep.mubr.f32.mxu0 0.0
        %856 = vmatmul.mubr.f32.gmra.mrb[0].mxu0 %v377
        %v857 = vpop.f32.mrb[0].mxu0
        %v858 = vadd.f32 0.0, %v857
        %v859 = vpop.f32.mrb[0].mxu0
        %860 = vdwg.mxu0
        %v861 = vadd.f32 %v622, %v783
        %v862 = vadd.f32 %v627, %v788
        %v863 = vadd.f32 %v632, %v793
        %v864 = vadd.f32 %v637, %v798
        %v865 = vadd.f32 %v642, %v803
        %v866 = vadd.f32 %v647, %v808
        %v867 = vadd.f32 %v652, %v813
        %v868 = vadd.f32 %v657, %v818
        %v869 = vadd.f32 %v662, %v823
        %v870 = vadd.f32 %v667, %v828
        %v871 = vadd.f32 %v672, %v833
        %v872 = vadd.f32 %v677, %v838
        %v873 = vadd.f32 %v682, %v843
        %v874 = vadd.f32 %v687, %v848
        %v875 = vadd.f32 %v692, %v853
        %v876 = vadd.f32 %v697, %v858
        %v877 = vld [vmem:[%s3] sm:$0x1]
        %v878 = vlaneseq
        %v879 = vshrl.u32 %v878, 7
        %v880 = vsub.s32 0, %v879
        %v881 = vrot.slane %v877, %v880
        %v882 = vadd.f32 %v861, %v881
        %v883 = vadd.f32 %v862, %v881
        %v884 = vadd.f32 %v863, %v881
        %v885 = vadd.f32 %v864, %v881
        %v886 = vadd.f32 %v865, %v881
        %v887 = vadd.f32 %v866, %v881
        %v888 = vadd.f32 %v867, %v881
        %v889 = vadd.f32 %v868, %v881
        %v890 = vadd.f32 %v869, %v881
        %v891 = vadd.f32 %v870, %v881
        %v892 = vadd.f32 %v871, %v881
        %v893 = vadd.f32 %v872, %v881
        %v894 = vadd.f32 %v873, %v881
        %v895 = vadd.f32 %v874, %v881
        %v896 = vadd.f32 %v875, %v881
        %v897 = vadd.f32 %v876, %v881
        %v898 = vmax.f32 %v882, 0.0
        %v899 = vmax.f32 %v883, 0.0
        %v900 = vmax.f32 %v884, 0.0
        %v901 = vmax.f32 %v885, 0.0
        %v902 = vmax.f32 %v886, 0.0
        %v903 = vmax.f32 %v887, 0.0
        %v904 = vmax.f32 %v888, 0.0
        %v905 = vmax.f32 %v889, 0.0
        %v906 = vmax.f32 %v890, 0.0
        %v907 = vmax.f32 %v891, 0.0
        %v908 = vmax.f32 %v892, 0.0
        %v909 = vmax.f32 %v893, 0.0
        %v910 = vmax.f32 %v894, 0.0
        %v911 = vmax.f32 %v895, 0.0
        %v912 = vmax.f32 %v896, 0.0
        %v913 = vmax.f32 %v897, 0.0
        %v930 = vrot.slane %v898, 7
        %v931 = vrot.slane %v899, 7
        %v932 = vsel %vm280, %v930, %v931
        %v933 = vrot.slane %v900, 7
        %v934 = vrot.slane %v901, 7
        %v935 = vsel %vm280, %v933, %v934
        %v936 = vrot.slane %v902, 7
        %v937 = vrot.slane %v903, 7
        %v938 = vsel %vm280, %v936, %v937
        %v939 = vrot.slane %v904, 7
        %v940 = vrot.slane %v905, 7
        %v941 = vsel %vm280, %v939, %v940
        %v942 = vrot.slane %v906, 7
        %v943 = vrot.slane %v907, 7
        %v944 = vsel %vm280, %v942, %v943
        %v945 = vrot.slane %v908, 7
        %v946 = vrot.slane %v909, 7
        %v947 = vsel %vm280, %v945, %v946
        %v948 = vrot.slane %v910, 7
        %v949 = vrot.slane %v911, 7
        %v950 = vsel %vm280, %v948, %v949
        %v951 = vrot.slane %v912, 7
        %v952 = vrot.slane %v913, 7
        %v953 = vsel %vm280, %v951, %v952
        %v970 = vsel %vm280, 0.0, %v930
        %v971 = vsel %vm280, 0.0, %v933
        %v972 = vsel %vm280, 0.0, %v936
        %v973 = vsel %vm280, 0.0, %v939
        %v974 = vsel %vm280, 0.0, %v942
        %v975 = vsel %vm280, 0.0, %v945
        %v976 = vsel %vm280, 0.0, %v948
        %v977 = vsel %vm280, 0.0, %v951
        %v978 = vrot.slane %v898, 1
        %v979 = vrot.slane %v899, 1
        %v980 = vsel %vm329, %v978, %v979
        %v981 = vrot.slane %v900, 1
        %v982 = vrot.slane %v901, 1
        %v983 = vsel %vm329, %v981, %v982
        %v984 = vrot.slane %v902, 1
        %v985 = vrot.slane %v903, 1
        %v986 = vsel %vm329, %v984, %v985
        %v987 = vrot.slane %v904, 1
        %v988 = vrot.slane %v905, 1
        %v989 = vsel %vm329, %v987, %v988
        %v990 = vrot.slane %v906, 1
        %v991 = vrot.slane %v907, 1
        %v992 = vsel %vm329, %v990, %v991
        %v993 = vrot.slane %v908, 1
        %v994 = vrot.slane %v909, 1
        %v995 = vsel %vm329, %v993, %v994
        %v996 = vrot.slane %v910, 1
        %v997 = vrot.slane %v911, 1
        %v998 = vsel %vm329, %v996, %v997
        %v999 = vrot.slane %v912, 1
        %v1000 = vrot.slane %v913, 1
        %v1001 = vsel %vm329, %v999, %v1000
        %v1018 = vsel %vm329, %v979, 0.0
        %v1019 = vsel %vm329, %v982, 0.0
        %v1020 = vsel %vm329, %v985, 0.0
        %v1021 = vsel %vm329, %v988, 0.0
        %v1022 = vsel %vm329, %v991, 0.0
        %v1023 = vsel %vm329, %v994, 0.0
        %v1024 = vsel %vm329, %v997, 0.0
        %v1025 = vsel %vm329, %v1000, 0.0
        %v1026 = vld [vmem:[#allocation7] sm:$0xff]
        %v1027 = vld [vmem:[#allocation7 + $0x8] sm:$0xff]
        %v1028 = vld [vmem:[#allocation7 + $0x10] sm:$0xff]
        %v1029 = vld [vmem:[#allocation7 + $0x18] sm:$0xff]
        %v1030 = vld [vmem:[#allocation7 + $0x20] sm:$0xff]
        %v1031 = vld [vmem:[#allocation7 + $0x28] sm:$0xff]
        %v1032 = vld [vmem:[#allocation7 + $0x30] sm:$0xff]
        %v1033 = vld [vmem:[#allocation7 + $0x38] sm:$0xff]
        %v1034 = vld [vmem:[#allocation7 + $0x40] sm:$0xff]
        %v1035 = vld [vmem:[#allocation7 + $0x48] sm:$0xff]
        %v1036 = vld [vmem:[#allocation7 + $0x50] sm:$0xff]
        %v1037 = vld [vmem:[#allocation7 + $0x58] sm:$0xff]
        %v1038 = vld [vmem:[#allocation7 + $0x60] sm:$0xff]
        %v1039 = vld [vmem:[#allocation7 + $0x68] sm:$0xff]
        %v1040 = vld [vmem:[#allocation7 + $0x70] sm:$0xff]
        %v1041 = vld [vmem:[#allocation7 + $0x78] sm:$0xff]
        %v1042 = vld [vmem:[#allocation7 + $0x80] sm:$0xff]
        %v1043 = vld [vmem:[#allocation7 + $0x88] sm:$0xff]
        %v1044 = vld [vmem:[#allocation7 + $0x90] sm:$0xff]
        %v1045 = vld [vmem:[#allocation7 + $0x98] sm:$0xff]
        %v1046 = vld [vmem:[#allocation7 + $0xa0] sm:$0xff]
        %v1047 = vld [vmem:[#allocation7 + $0xa8] sm:$0xff]
        %v1048 = vld [vmem:[#allocation7 + $0xb0] sm:$0xff]
        %v1049 = vld [vmem:[#allocation7 + $0xb8] sm:$0xff]
        %v1050 = vld [vmem:[#allocation7 + $0xc0] sm:$0xff]
        %v1051 = vld [vmem:[#allocation7 + $0xc8] sm:$0xff]
        %v1052 = vld [vmem:[#allocation7 + $0xd0] sm:$0xff]
        %v1053 = vld [vmem:[#allocation7 + $0xd8] sm:$0xff]
        %v1054 = vld [vmem:[#allocation7 + $0xe0] sm:$0xff]
        %v1055 = vld [vmem:[#allocation7 + $0xe8] sm:$0xff]
        %v1056 = vld [vmem:[#allocation7 + $0xf0] sm:$0xff]
        %v1057 = vld [vmem:[#allocation7 + $0xf8] sm:$0xff]
        %1058 = vmatprep.subr.mxu0 0.0
        %1059 = vmatpush1.msra.mxu0 %v1042
        %1060 = vmatprep.subr.mxu0 0.0
        %1061 = vmatpush1.msra.mxu0 %v1043
        %1062 = vmatprep.subr.mxu0 0.0
        %1063 = vmatpush1.msra.mxu0 %v1044
        %1064 = vmatprep.subr.mxu0 0.0
        %1065 = vmatpush1.msra.mxu0 %v1045
        %1066 = vmatprep.subr.mxu0 0.0
        %1067 = vmatpush1.msra.mxu0 %v1046
        %1068 = vmatprep.subr.mxu0 0.0
        %1069 = vmatpush1.msra.mxu0 %v1047
        %1070 = vmatprep.subr.mxu0 0.0
        %1071 = vmatpush1.msra.mxu0 %v1048
        %1072 = vmatprep.subr.mxu0 0.0
        %1073 = vmatpush1.msra.mxu0 %v1049
        %1074 = vmatprep.subr.mxu0 0.0
        %1075 = vmatpush1.msra.mxu0 %v1050
        %1076 = vmatprep.subr.mxu0 0.0
        %1077 = vmatpush1.msra.mxu0 %v1051
        %1078 = vmatprep.subr.mxu0 0.0
        %1079 = vmatpush1.msra.mxu0 %v1052
        %1080 = vmatprep.subr.mxu0 0.0
        %1081 = vmatpush1.msra.mxu0 %v1053
        %1082 = vmatprep.subr.mxu0 0.0
        %1083 = vmatpush1.msra.mxu0 %v1054
        %1084 = vmatprep.subr.mxu0 0.0
        %1085 = vmatpush1.msra.mxu0 %v1055
        %1086 = vmatprep.subr.mxu0 0.0
        %1087 = vmatpush1.msra.mxu0 %v1056
        %1088 = vmatprep.subr.mxu0 0.0
        %1089 = vmatpush1.msra.mxu0 %v1057
        %1090 = vmatprep.subr.mxu0 0.0
        %1091 = vmatpush1.msra.mxu0 0.0
        %1092 = vmatprep.subr.mxu0 0.0
        %1093 = vmatpush1.msra.mxu0 0.0
        %1094 = vmatprep.subr.mxu0 0.0
        %1095 = vmatpush1.msra.mxu0 0.0
        %1096 = vmatprep.subr.mxu0 0.0
        %1097 = vmatpush1.msra.mxu0 0.0
        %1098 = vmatprep.subr.mxu0 0.0
        %1099 = vmatpush1.msra.mxu0 0.0
        %1100 = vmatprep.subr.mxu0 0.0
        %1101 = vmatpush1.msra.mxu0 0.0
        %1102 = vmatprep.subr.mxu0 0.0
        %1103 = vmatpush1.msra.mxu0 0.0
        %1104 = vmatprep.subr.mxu0 0.0
        %1105 = vmatpush1.msra.mxu0 0.0
        %1106 = vmatprep.subr.mxu0 0.0
        %1107 = vmatpush1.msra.mxu0 0.0
        %1108 = vmatprep.subr.mxu0 0.0
        %1109 = vmatpush1.msra.mxu0 0.0
        %1110 = vmatprep.subr.mxu0 0.0
        %1111 = vmatpush1.msra.mxu0 0.0
        %1112 = vmatprep.subr.mxu0 0.0
        %1113 = vmatpush1.msra.mxu0 0.0
        %1114 = vmatprep.subr.mxu0 0.0
        %1115 = vmatpush1.msra.mxu0 0.0
        %1116 = vmatprep.subr.mxu0 0.0
        %1117 = vmatpush1.msra.mxu0 0.0
        %1118 = vmatprep.subr.mxu0 0.0
        %1119 = vmatpush1.msra.mxu0 0.0
        %1120 = vmatprep.subr.mxu0 0.0
        %1121 = vmatpush1.msra.mxu0 0.0
        %1122 = vmatprep.mubr.f32.mxu0 0.0
        %1123 = vmatmul.mubr.f32.gmra.mrb[0].mxu0 %v898
        %v1124 = vpop.f32.mrb[0].mxu0
        %v1125 = vadd.f32 0.0, %v1124
        %v1126 = vpop.f32.mrb[0].mxu0
        %1127 = vmatprep.mubr.f32.mxu0 0.0
        %1128 = vmatmul.mubr.f32.gmra.mrb[0].mxu0 %v899
        %v1129 = vpop.f32.mrb[0].mxu0
        %v1130 = vadd.f32 0.0, %v1129
        %v1131 = vpop.f32.mrb[0].mxu0
        %1132 = vmatprep.mubr.f32.mxu0 0.0
        %1133 = vmatmul.mubr.f32.gmra.mrb[0].mxu0 %v900
        %v1134 = vpop.f32.mrb[0].mxu0
        %v1135 = vadd.f32 0.0, %v1134
        %v1136 = vpop.f32.mrb[0].mxu0
        %1137 = vmatprep.mubr.f32.mxu0 0.0
        %1138 = vmatmul.mubr.f32.gmra.mrb[0].mxu0 %v901
        %v1139 = vpop.f32.mrb[0].mxu0
        %v1140 = vadd.f32 0.0, %v1139
        %v1141 = vpop.f32.mrb[0].mxu0
        %1142 = vmatprep.mubr.f32.mxu0 0.0
        %1143 = vmatmul.mubr.f32.gmra.mrb[0].mxu0 %v902
        %v1144 = vpop.f32.mrb[0].mxu0
        %v1145 = vadd.f32 0.0, %v1144
        %v1146 = vpop.f32.mrb[0].mxu0
        %1147 = vmatprep.mubr.f32.mxu0 0.0
        %1148 = vmatmul.mubr.f32.gmra.mrb[0].mxu0 %v903
        %v1149 = vpop.f32.mrb[0].mxu0
        %v1150 = vadd.f32 0.0, %v1149
        %v1151 = vpop.f32.mrb[0].mxu0
        %1152 = vmatprep.mubr.f32.mxu0 0.0
        %1153 = vmatmul.mubr.f32.gmra.mrb[0].mxu0 %v904
        %v1154 = vpop.f32.mrb[0].mxu0
        %v1155 = vadd.f32 0.0, %v1154
        %v1156 = vpop.f32.mrb[0].mxu0
        %1157 = vmatprep.mubr.f32.mxu0 0.0
        %1158 = vmatmul.mubr.f32.gmra.mrb[0].mxu0 %v905
        %v1159 = vpop.f32.mrb[0].mxu0
        %v1160 = vadd.f32 0.0, %v1159
        %v1161 = vpop.f32.mrb[0].mxu0
        %1162 = vmatprep.mubr.f32.mxu0 0.0
        %1163 = vmatmul.mubr.f32.gmra.mrb[0].mxu0 %v906
        %v1164 = vpop.f32.mrb[0].mxu0
        %v1165 = vadd.f32 0.0, %v1164
        %v1166 = vpop.f32.mrb[0].mxu0
        %1167 = vmatprep.mubr.f32.mxu0 0.0
        %1168 = vmatmul.mubr.f32.gmra.mrb[0].mxu0 %v907
        %v1169 = vpop.f32.mrb[0].mxu0
        %v1170 = vadd.f32 0.0, %v1169
        %v1171 = vpop.f32.mrb[0].mxu0
        %1172 = vmatprep.mubr.f32.mxu0 0.0
        %1173 = vmatmul.mubr.f32.gmra.mrb[0].mxu0 %v908
        %v1174 = vpop.f32.mrb[0].mxu0
        %v1175 = vadd.f32 0.0, %v1174
        %v1176 = vpop.f32.mrb[0].mxu0
        %1177 = vmatprep.mubr.f32.mxu0 0.0
        %1178 = vmatmul.mubr.f32.gmra.mrb[0].mxu0 %v909
        %v1179 = vpop.f32.mrb[0].mxu0
        %v1180 = vadd.f32 0.0, %v1179
        %v1181 = vpop.f32.mrb[0].mxu0
        %1182 = vmatprep.mubr.f32.mxu0 0.0
        %1183 = vmatmul.mubr.f32.gmra.mrb[0].mxu0 %v910
        %v1184 = vpop.f32.mrb[0].mxu0
        %v1185 = vadd.f32 0.0, %v1184
        %v1186 = vpop.f32.mrb[0].mxu0
        %1187 = vmatprep.mubr.f32.mxu0 0.0
        %1188 = vmatmul.mubr.f32.gmra.mrb[0].mxu0 %v911
        %v1189 = vpop.f32.mrb[0].mxu0
        %v1190 = vadd.f32 0.0, %v1189
        %v1191 = vpop.f32.mrb[0].mxu0
        %1192 = vmatprep.mubr.f32.mxu0 0.0
        %1193 = vmatmul.mubr.f32.gmra.mrb[0].mxu0 %v912
        %v1194 = vpop.f32.mrb[0].mxu0
        %v1195 = vadd.f32 0.0, %v1194
        %v1196 = vpop.f32.mrb[0].mxu0
        %1197 = vmatprep.mubr.f32.mxu0 0.0
        %1198 = vmatmul.mubr.f32.gmra.mrb[0].mxu0 %v913
        %v1199 = vpop.f32.mrb[0].mxu0
        %v1200 = vadd.f32 0.0, %v1199
        %v1201 = vpop.f32.mrb[0].mxu0
        %1202 = vdwg.mxu0
        %1203 = vmatprep.subr.mxu0 0.0
        %1204 = vmatpush1.msra.mxu0 %v1026
        %1205 = vmatprep.subr.mxu0 0.0
        %1206 = vmatpush1.msra.mxu0 %v1027
        %1207 = vmatprep.subr.mxu0 0.0
        %1208 = vmatpush1.msra.mxu0 %v1028
        %1209 = vmatprep.subr.mxu0 0.0
        %1210 = vmatpush1.msra.mxu0 %v1029
        %1211 = vmatprep.subr.mxu0 0.0
        %1212 = vmatpush1.msra.mxu0 %v1030
        %1213 = vmatprep.subr.mxu0 0.0
        %1214 = vmatpush1.msra.mxu0 %v1031
        %1215 = vmatprep.subr.mxu0 0.0
        %1216 = vmatpush1.msra.mxu0 %v1032
        %1217 = vmatprep.subr.mxu0 0.0
        %1218 = vmatpush1.msra.mxu0 %v1033
        %1219 = vmatprep.subr.mxu0 0.0
        %1220 = vmatpush1.msra.mxu0 %v1034
        %1221 = vmatprep.subr.mxu0 0.0
        %1222 = vmatpush1.msra.mxu0 %v1035
        %1223 = vmatprep.subr.mxu0 0.0
        %1224 = vmatpush1.msra.mxu0 %v1036
        %1225 = vmatprep.subr.mxu0 0.0
        %1226 = vmatpush1.msra.mxu0 %v1037
        %1227 = vmatprep.subr.mxu0 0.0
        %1228 = vmatpush1.msra.mxu0 %v1038
        %1229 = vmatprep.subr.mxu0 0.0
        %1230 = vmatpush1.msra.mxu0 %v1039
        %1231 = vmatprep.subr.mxu0 0.0
        %1232 = vmatpush1.msra.mxu0 %v1040
        %1233 = vmatprep.subr.mxu0 0.0
        %1234 = vmatpush1.msra.mxu0 %v1041
        %1235 = vmatprep.subr.mxu0 0.0
        %1236 = vmatpush1.msra.mxu0 0.0
        %1237 = vmatprep.subr.mxu0 0.0
        %1238 = vmatpush1.msra.mxu0 0.0
        %1239 = vmatprep.subr.mxu0 0.0
        %1240 = vmatpush1.msra.mxu0 0.0
        %1241 = vmatprep.subr.mxu0 0.0
        %1242 = vmatpush1.msra.mxu0 0.0
        %1243 = vmatprep.subr.mxu0 0.0
        %1244 = vmatpush1.msra.mxu0 0.0
        %1245 = vmatprep.subr.mxu0 0.0
        %1246 = vmatpush1.msra.mxu0 0.0
        %1247 = vmatprep.subr.mxu0 0.0
        %1248 = vmatpush1.msra.mxu0 0.0
        %1249 = vmatprep.subr.mxu0 0.0
        %1250 = vmatpush1.msra.mxu0 0.0
        %1251 = vmatprep.subr.mxu0 0.0
        %1252 = vmatpush1.msra.mxu0 0.0
        %1253 = vmatprep.subr.mxu0 0.0
        %1254 = vmatpush1.msra.mxu0 0.0
        %1255 = vmatprep.subr.mxu0 0.0
        %1256 = vmatpush1.msra.mxu0 0.0
        %1257 = vmatprep.subr.mxu0 0.0
        %1258 = vmatpush1.msra.mxu0 0.0
        %1259 = vmatprep.subr.mxu0 0.0
        %1260 = vmatpush1.msra.mxu0 0.0
        %1261 = vmatprep.subr.mxu0 0.0
        %1262 = vmatpush1.msra.mxu0 0.0
        %1263 = vmatprep.subr.mxu0 0.0
        %1264 = vmatpush1.msra.mxu0 0.0
        %1265 = vmatprep.subr.mxu0 0.0
        %1266 = vmatpush1.msra.mxu0 0.0
        %1267 = vmatprep.mubr.f32.mxu0 0.0
        %1268 = vmatmul.mubr.f32.gmra.mrb[0].mxu0 %v970
        %v1269 = vpop.f32.mrb[0].mxu0
        %v1270 = vadd.f32 %v1125, %v1269
        %v1271 = vpop.f32.mrb[0].mxu0
        %1272 = vmatprep.mubr.f32.mxu0 0.0
        %1273 = vmatmul.mubr.f32.gmra.mrb[0].mxu0 %v932
        %v1274 = vpop.f32.mrb[0].mxu0
        %v1275 = vadd.f32 %v1130, %v1274
        %v1276 = vpop.f32.mrb[0].mxu0
        %1277 = vmatprep.mubr.f32.mxu0 0.0
        %1278 = vmatmul.mubr.f32.gmra.mrb[0].mxu0 %v971
        %v1279 = vpop.f32.mrb[0].mxu0
        %v1280 = vadd.f32 %v1135, %v1279
        %v1281 = vpop.f32.mrb[0].mxu0
        %1282 = vmatprep.mubr.f32.mxu0 0.0
        %1283 = vmatmul.mubr.f32.gmra.mrb[0].mxu0 %v935
        %v1284 = vpop.f32.mrb[0].mxu0
        %v1285 = vadd.f32 %v1140, %v1284
        %v1286 = vpop.f32.mrb[0].mxu0
        %1287 = vmatprep.mubr.f32.mxu0 0.0
        %1288 = vmatmul.mubr.f32.gmra.mrb[0].mxu0 %v972
        %v1289 = vpop.f32.mrb[0].mxu0
        %v1290 = vadd.f32 %v1145, %v1289
        %v1291 = vpop.f32.mrb[0].mxu0
        %1292 = vmatprep.mubr.f32.mxu0 0.0
        %1293 = vmatmul.mubr.f32.gmra.mrb[0].mxu0 %v938
        %v1294 = vpop.f32.mrb[0].mxu0
        %v1295 = vadd.f32 %v1150, %v1294
        %v1296 = vpop.f32.mrb[0].mxu0
        %1297 = vmatprep.mubr.f32.mxu0 0.0
        %1298 = vmatmul.mubr.f32.gmra.mrb[0].mxu0 %v973
        %v1299 = vpop.f32.mrb[0].mxu0
        %v1300 = vadd.f32 %v1155, %v1299
        %v1301 = vpop.f32.mrb[0].mxu0
        %1302 = vmatprep.mubr.f32.mxu0 0.0
        %1303 = vmatmul.mubr.f32.gmra.mrb[0].mxu0 %v941
        %v1304 = vpop.f32.mrb[0].mxu0
        %v1305 = vadd.f32 %v1160, %v1304
        %v1306 = vpop.f32.mrb[0].mxu0
        %1307 = vmatprep.mubr.f32.mxu0 0.0
        %1308 = vmatmul.mubr.f32.gmra.mrb[0].mxu0 %v974
        %v1309 = vpop.f32.mrb[0].mxu0
        %v1310 = vadd.f32 %v1165, %v1309
        %v1311 = vpop.f32.mrb[0].mxu0
        %1312 = vmatprep.mubr.f32.mxu0 0.0
        %1313 = vmatmul.mubr.f32.gmra.mrb[0].mxu0 %v944
        %v1314 = vpop.f32.mrb[0].mxu0
        %v1315 = vadd.f32 %v1170, %v1314
        %v1316 = vpop.f32.mrb[0].mxu0
        %1317 = vmatprep.mubr.f32.mxu0 0.0
        %1318 = vmatmul.mubr.f32.gmra.mrb[0].mxu0 %v975
        %v1319 = vpop.f32.mrb[0].mxu0
        %v1320 = vadd.f32 %v1175, %v1319
        %v1321 = vpop.f32.mrb[0].mxu0
        %1322 = vmatprep.mubr.f32.mxu0 0.0
        %1323 = vmatmul.mubr.f32.gmra.mrb[0].mxu0 %v947
        %v1324 = vpop.f32.mrb[0].mxu0
        %v1325 = vadd.f32 %v1180, %v1324
        %v1326 = vpop.f32.mrb[0].mxu0
        %1327 = vmatprep.mubr.f32.mxu0 0.0
        %1328 = vmatmul.mubr.f32.gmra.mrb[0].mxu0 %v976
        %v1329 = vpop.f32.mrb[0].mxu0
        %v1330 = vadd.f32 %v1185, %v1329
        %v1331 = vpop.f32.mrb[0].mxu0
        %1332 = vmatprep.mubr.f32.mxu0 0.0
        %1333 = vmatmul.mubr.f32.gmra.mrb[0].mxu0 %v950
        %v1334 = vpop.f32.mrb[0].mxu0
        %v1335 = vadd.f32 %v1190, %v1334
        %v1336 = vpop.f32.mrb[0].mxu0
        %1337 = vmatprep.mubr.f32.mxu0 0.0
        %1338 = vmatmul.mubr.f32.gmra.mrb[0].mxu0 %v977
        %v1339 = vpop.f32.mrb[0].mxu0
        %v1340 = vadd.f32 %v1195, %v1339
        %v1341 = vpop.f32.mrb[0].mxu0
        %1342 = vmatprep.mubr.f32.mxu0 0.0
        %1343 = vmatmul.mubr.f32.gmra.mrb[0].mxu0 %v953
        %v1344 = vpop.f32.mrb[0].mxu0
        %v1345 = vadd.f32 %v1200, %v1344
        %v1346 = vpop.f32.mrb[0].mxu0
        %1347 = vdwg.mxu0
        %v1348 = vld [vmem:[#allocation7 + $0x100] sm:$0xff]
        %v1349 = vld [vmem:[#allocation7 + $0x108] sm:$0xff]
        %v1350 = vld [vmem:[#allocation7 + $0x110] sm:$0xff]
        %v1351 = vld [vmem:[#allocation7 + $0x118] sm:$0xff]
        %v1352 = vld [vmem:[#allocation7 + $0x120] sm:$0xff]
        %v1353 = vld [vmem:[#allocation7 + $0x128] sm:$0xff]
        %v1354 = vld [vmem:[#allocation7 + $0x130] sm:$0xff]
        %v1355 = vld [vmem:[#allocation7 + $0x138] sm:$0xff]
        %v1356 = vld [vmem:[#allocation7 + $0x140] sm:$0xff]
        %v1357 = vld [vmem:[#allocation7 + $0x148] sm:$0xff]
        %v1358 = vld [vmem:[#allocation7 + $0x150] sm:$0xff]
        %v1359 = vld [vmem:[#allocation7 + $0x158] sm:$0xff]
        %v1360 = vld [vmem:[#allocation7 + $0x160] sm:$0xff]
        %v1361 = vld [vmem:[#allocation7 + $0x168] sm:$0xff]
        %v1362 = vld [vmem:[#allocation7 + $0x170] sm:$0xff]
        %v1363 = vld [vmem:[#allocation7 + $0x178] sm:$0xff]
        %1364 = vmatprep.subr.mxu0 0.0
        %1365 = vmatpush1.msra.mxu0 %v1348
        %1366 = vmatprep.subr.mxu0 0.0
        %1367 = vmatpush1.msra.mxu0 %v1349
        %1368 = vmatprep.subr.mxu0 0.0
        %1369 = vmatpush1.msra.mxu0 %v1350
        %1370 = vmatprep.subr.mxu0 0.0
        %1371 = vmatpush1.msra.mxu0 %v1351
        %1372 = vmatprep.subr.mxu0 0.0
        %1373 = vmatpush1.msra.mxu0 %v1352
        %1374 = vmatprep.subr.mxu0 0.0
        %1375 = vmatpush1.msra.mxu0 %v1353
        %1376 = vmatprep.subr.mxu0 0.0
        %1377 = vmatpush1.msra.mxu0 %v1354
        %1378 = vmatprep.subr.mxu0 0.0
        %1379 = vmatpush1.msra.mxu0 %v1355
        %1380 = vmatprep.subr.mxu0 0.0
        %1381 = vmatpush1.msra.mxu0 %v1356
        %1382 = vmatprep.subr.mxu0 0.0
        %1383 = vmatpush1.msra.mxu0 %v1357
        %1384 = vmatprep.subr.mxu0 0.0
        %1385 = vmatpush1.msra.mxu0 %v1358
        %1386 = vmatprep.subr.mxu0 0.0
        %1387 = vmatpush1.msra.mxu0 %v1359
        %1388 = vmatprep.subr.mxu0 0.0
        %1389 = vmatpush1.msra.mxu0 %v1360
        %1390 = vmatprep.subr.mxu0 0.0
        %1391 = vmatpush1.msra.mxu0 %v1361
        %1392 = vmatprep.subr.mxu0 0.0
        %1393 = vmatpush1.msra.mxu0 %v1362
        %1394 = vmatprep.subr.mxu0 0.0
        %1395 = vmatpush1.msra.mxu0 %v1363
        %1396 = vmatprep.subr.mxu0 0.0
        %1397 = vmatpush1.msra.mxu0 0.0
        %1398 = vmatprep.subr.mxu0 0.0
        %1399 = vmatpush1.msra.mxu0 0.0
        %1400 = vmatprep.subr.mxu0 0.0
        %1401 = vmatpush1.msra.mxu0 0.0
        %1402 = vmatprep.subr.mxu0 0.0
        %1403 = vmatpush1.msra.mxu0 0.0
        %1404 = vmatprep.subr.mxu0 0.0
        %1405 = vmatpush1.msra.mxu0 0.0
        %1406 = vmatprep.subr.mxu0 0.0
        %1407 = vmatpush1.msra.mxu0 0.0
        %1408 = vmatprep.subr.mxu0 0.0
        %1409 = vmatpush1.msra.mxu0 0.0
        %1410 = vmatprep.subr.mxu0 0.0
        %1411 = vmatpush1.msra.mxu0 0.0
        %1412 = vmatprep.subr.mxu0 0.0
        %1413 = vmatpush1.msra.mxu0 0.0
        %1414 = vmatprep.subr.mxu0 0.0
        %1415 = vmatpush1.msra.mxu0 0.0
        %1416 = vmatprep.subr.mxu0 0.0
        %1417 = vmatpush1.msra.mxu0 0.0
        %1418 = vmatprep.subr.mxu0 0.0
        %1419 = vmatpush1.msra.mxu0 0.0
        %1420 = vmatprep.subr.mxu0 0.0
        %1421 = vmatpush1.msra.mxu0 0.0
        %1422 = vmatprep.subr.mxu0 0.0
        %1423 = vmatpush1.msra.mxu0 0.0
        %1424 = vmatprep.subr.mxu0 0.0
        %1425 = vmatpush1.msra.mxu0 0.0
        %1426 = vmatprep.subr.mxu0 0.0
        %1427 = vmatpush1.msra.mxu0 0.0
        %1428 = vmatprep.mubr.f32.mxu0 0.0
        %1429 = vmatmul.mubr.f32.gmra.mrb[0].mxu0 %v980
        %v1430 = vpop.f32.mrb[0].mxu0
        %v1431 = vadd.f32 0.0, %v1430
        %v1432 = vpop.f32.mrb[0].mxu0
        %1433 = vmatprep.mubr.f32.mxu0 0.0
        %1434 = vmatmul.mubr.f32.gmra.mrb[0].mxu0 %v1018
        %v1435 = vpop.f32.mrb[0].mxu0
        %v1436 = vadd.f32 0.0, %v1435
        %v1437 = vpop.f32.mrb[0].mxu0
        %1438 = vmatprep.mubr.f32.mxu0 0.0
        %1439 = vmatmul.mubr.f32.gmra.mrb[0].mxu0 %v983
        %v1440 = vpop.f32.mrb[0].mxu0
        %v1441 = vadd.f32 0.0, %v1440
        %v1442 = vpop.f32.mrb[0].mxu0
        %1443 = vmatprep.mubr.f32.mxu0 0.0
        %1444 = vmatmul.mubr.f32.gmra.mrb[0].mxu0 %v1019
        %v1445 = vpop.f32.mrb[0].mxu0
        %v1446 = vadd.f32 0.0, %v1445
        %v1447 = vpop.f32.mrb[0].mxu0
        %1448 = vmatprep.mubr.f32.mxu0 0.0
        %1449 = vmatmul.mubr.f32.gmra.mrb[0].mxu0 %v986
        %v1450 = vpop.f32.mrb[0].mxu0
        %v1451 = vadd.f32 0.0, %v1450
        %v1452 = vpop.f32.mrb[0].mxu0
        %1453 = vmatprep.mubr.f32.mxu0 0.0
        %1454 = vmatmul.mubr.f32.gmra.mrb[0].mxu0 %v1020
        %v1455 = vpop.f32.mrb[0].mxu0
        %v1456 = vadd.f32 0.0, %v1455
        %v1457 = vpop.f32.mrb[0].mxu0
        %1458 = vmatprep.mubr.f32.mxu0 0.0
        %1459 = vmatmul.mubr.f32.gmra.mrb[0].mxu0 %v989
        %v1460 = vpop.f32.mrb[0].mxu0
        %v1461 = vadd.f32 0.0, %v1460
        %v1462 = vpop.f32.mrb[0].mxu0
        %1463 = vmatprep.mubr.f32.mxu0 0.0
        %1464 = vmatmul.mubr.f32.gmra.mrb[0].mxu0 %v1021
        %v1465 = vpop.f32.mrb[0].mxu0
        %v1466 = vadd.f32 0.0, %v1465
        %v1467 = vpop.f32.mrb[0].mxu0
        %1468 = vmatprep.mubr.f32.mxu0 0.0
        %1469 = vmatmul.mubr.f32.gmra.mrb[0].mxu0 %v992
        %v1470 = vpop.f32.mrb[0].mxu0
        %v1471 = vadd.f32 0.0, %v1470
        %v1472 = vpop.f32.mrb[0].mxu0
        %1473 = vmatprep.mubr.f32.mxu0 0.0
        %1474 = vmatmul.mubr.f32.gmra.mrb[0].mxu0 %v1022
        %v1475 = vpop.f32.mrb[0].mxu0
        %v1476 = vadd.f32 0.0, %v1475
        %v1477 = vpop.f32.mrb[0].mxu0
        %1478 = vmatprep.mubr.f32.mxu0 0.0
        %1479 = vmatmul.mubr.f32.gmra.mrb[0].mxu0 %v995
        %v1480 = vpop.f32.mrb[0].mxu0
        %v1481 = vadd.f32 0.0, %v1480
        %v1482 = vpop.f32.mrb[0].mxu0
        %1483 = vmatprep.mubr.f32.mxu0 0.0
        %1484 = vmatmul.mubr.f32.gmra.mrb[0].mxu0 %v1023
        %v1485 = vpop.f32.mrb[0].mxu0
        %v1486 = vadd.f32 0.0, %v1485
        %v1487 = vpop.f32.mrb[0].mxu0
        %1488 = vmatprep.mubr.f32.mxu0 0.0
        %1489 = vmatmul.mubr.f32.gmra.mrb[0].mxu0 %v998
        %v1490 = vpop.f32.mrb[0].mxu0
        %v1491 = vadd.f32 0.0, %v1490
        %v1492 = vpop.f32.mrb[0].mxu0
        %1493 = vmatprep.mubr.f32.mxu0 0.0
        %1494 = vmatmul.mubr.f32.gmra.mrb[0].mxu0 %v1024
        %v1495 = vpop.f32.mrb[0].mxu0
        %v1496 = vadd.f32 0.0, %v1495
        %v1497 = vpop.f32.mrb[0].mxu0
        %1498 = vmatprep.mubr.f32.mxu0 0.0
        %1499 = vmatmul.mubr.f32.gmra.mrb[0].mxu0 %v1001
        %v1500 = vpop.f32.mrb[0].mxu0
        %v1501 = vadd.f32 0.0, %v1500
        %v1502 = vpop.f32.mrb[0].mxu0
        %1503 = vmatprep.mubr.f32.mxu0 0.0
        %1504 = vmatmul.mubr.f32.gmra.mrb[0].mxu0 %v1025
        %v1505 = vpop.f32.mrb[0].mxu0
        %v1506 = vadd.f32 0.0, %v1505
        %v1507 = vpop.f32.mrb[0].mxu0
        %1508 = vdwg.mxu0
        %v1509 = vadd.f32 %v1270, %v1431
        %v1510 = vadd.f32 %v1275, %v1436
        %v1511 = vadd.f32 %v1280, %v1441
        %v1512 = vadd.f32 %v1285, %v1446
        %v1513 = vadd.f32 %v1290, %v1451
        %v1514 = vadd.f32 %v1295, %v1456
        %v1515 = vadd.f32 %v1300, %v1461
        %v1516 = vadd.f32 %v1305, %v1466
        %v1517 = vadd.f32 %v1310, %v1471
        %v1518 = vadd.f32 %v1315, %v1476
        %v1519 = vadd.f32 %v1320, %v1481
        %v1520 = vadd.f32 %v1325, %v1486
        %v1521 = vadd.f32 %v1330, %v1491
        %v1522 = vadd.f32 %v1335, %v1496
        %v1523 = vadd.f32 %v1340, %v1501
        %v1524 = vadd.f32 %v1345, %v1506
        %v1525 = vld [vmem:[%s3 + $0x1] sm:$0x1]
        %v1526 = vlaneseq
        %v1527 = vshrl.u32 %v1526, 7
        %v1528 = vsub.s32 0, %v1527
        %v1529 = vrot.slane %v1525, %v1528
        %v1530 = vadd.f32 %v1509, %v1529
        %v1531 = vadd.f32 %v1510, %v1529
        %v1532 = vadd.f32 %v1511, %v1529
        %v1533 = vadd.f32 %v1512, %v1529
        %v1534 = vadd.f32 %v1513, %v1529
        %v1535 = vadd.f32 %v1514, %v1529
        %v1536 = vadd.f32 %v1515, %v1529
        %v1537 = vadd.f32 %v1516, %v1529
        %v1538 = vadd.f32 %v1517, %v1529
        %v1539 = vadd.f32 %v1518, %v1529
        %v1540 = vadd.f32 %v1519, %v1529
        %v1541 = vadd.f32 %v1520, %v1529
        %v1542 = vadd.f32 %v1521, %v1529
        %v1543 = vadd.f32 %v1522, %v1529
        %v1544 = vadd.f32 %v1523, %v1529
        %v1545 = vadd.f32 %v1524, %v1529
        %v1546 = vadd.f32 %v1530, %v248
        %v1547 = vadd.f32 %v1531, %v249
        %v1548 = vadd.f32 %v1532, %v250
        %v1549 = vadd.f32 %v1533, %v251
        %v1550 = vadd.f32 %v1534, %v252
        %v1551 = vadd.f32 %v1535, %v253
        %v1552 = vadd.f32 %v1536, %v254
        %v1553 = vadd.f32 %v1537, %v255
        %v1554 = vadd.f32 %v1538, %v256
        %v1555 = vadd.f32 %v1539, %v257
        %v1556 = vadd.f32 %v1540, %v258
        %v1557 = vadd.f32 %v1541, %v259
        %v1558 = vadd.f32 %v1542, %v260
        %v1559 = vadd.f32 %v1543, %v261
        %v1560 = vadd.f32 %v1544, %v262
        %v1561 = vadd.f32 %v1545, %v263
        %v1562 = vmax.f32 %v1546, 0.0
        %v1563 = vmax.f32 %v1547, 0.0
        %v1564 = vmax.f32 %v1548, 0.0
        %v1565 = vmax.f32 %v1549, 0.0
        %v1566 = vmax.f32 %v1550, 0.0
        %v1567 = vmax.f32 %v1551, 0.0
        %v1568 = vmax.f32 %v1552, 0.0
        %v1569 = vmax.f32 %v1553, 0.0
        %v1570 = vmax.f32 %v1554, 0.0
        %v1571 = vmax.f32 %v1555, 0.0
        %v1572 = vmax.f32 %v1556, 0.0
        %v1573 = vmax.f32 %v1557, 0.0
        %v1574 = vmax.f32 %v1558, 0.0
        %v1575 = vmax.f32 %v1559, 0.0
        %v1576 = vmax.f32 %v1560, 0.0
        %v1577 = vmax.f32 %v1561, 0.0
        %1578 = vst [vmem:[%s245] sm:$0xff] %v1562
        %1579 = vst [vmem:[%s245 + $0x8] sm:$0xff] %v1563
        %1580 = vst [vmem:[%s245 + $0x10] sm:$0xff] %v1564
        %1581 = vst [vmem:[%s245 + $0x18] sm:$0xff] %v1565
        %1582 = vst [vmem:[%s245 + $0x20] sm:$0xff] %v1566
        %1583 = vst [vmem:[%s245 + $0x28] sm:$0xff] %v1567
        %1584 = vst [vmem:[%s245 + $0x30] sm:$0xff] %v1568
        %1585 = vst [vmem:[%s245 + $0x38] sm:$0xff] %v1569
        %1586 = vst [vmem:[%s245 + $0x40] sm:$0xff] %v1570
        %1587 = vst [vmem:[%s245 + $0x48] sm:$0xff] %v1571
        %1588 = vst [vmem:[%s245 + $0x50] sm:$0xff] %v1572
        %1589 = vst [vmem:[%s245 + $0x58] sm:$0xff] %v1573
        %1590 = vst [vmem:[%s245 + $0x60] sm:$0xff] %v1574
        %1591 = vst [vmem:[%s245 + $0x68] sm:$0xff] %v1575
        %1592 = vst [vmem:[%s245 + $0x70] sm:$0xff] %v1576
        %1593 = vst [vmem:[%s245 + $0x78] sm:$0xff] %v1577
        %s1594 = sand.u32 %s119, 1
        %s1595 = scalar_lea.sflag [#allocation4], %s1594
        %s1596 = sand.u32 %s119, 1
        %s1597 = smul.addr %s1596, 128
        %s1598 = scalar_lea.vmem [#allocation8], %s1597
        // Predicated region
        $region49: #{tpu_custom_call.1} parent=35 // pred_check
          %p1599 = pneg %p129
        $region50: #{tpu_custom_call.1} parent=35 // pred_check_branch
          %1601 = sbr.rel (%p1599) target = $region52
        $region51: #{tpu_custom_call.1} parent=35 // pred_region
          %s1602 = smul.u32 8, %s22
          %s1604 = ssub.s32 2048, 2048
          %1605 = vsyncadd %s1595, %s1604
          %s1606 = smul.addr %s1602, 2
          %s1607 = smul.addr %s1606, 128
          %s1608 = scalar_lea.hbm %s4, %s1607
          %s1609 = sshll.u32 %s1598, 4
          %s1610 = int_to_ptr.vmem [resolvable:$true] %s1609
          %1615 = dma.vmem_to_hbm [thread:$0]  %s1610, 2048, %s1608, %s1595, 128, 128, 8
        $region52: #{tpu_custom_call.1} parent=35 // pred_fallthru
          _
      $region36: #{tpu_custom_call.1} parent=5 // pred_fallthru
        _
      %p1616 = scmp.le.s32.totalorder 2, %s17
      // Predicated region
      $region53: #{tpu_custom_call.1} parent=5 // pred_check
        %p1617 = pneg %p1616
      $region54: #{tpu_custom_call.1} parent=5 // pred_check_branch
        %1619 = sbr.rel (%p1617) target = $region56
      $region55: #{tpu_custom_call.1} parent=5 // pred_region
        %s1620 = ssub.s32 %s17, 2
        // Predicated region
        $region57: #{tpu_custom_call.1} parent=55 // pred_check
          %p1621 = pneg %p135
        $region58: #{tpu_custom_call.1} parent=55 // pred_check_branch
          %1623 = sbr.rel (%p1621) target = $region60
        $region59: #{tpu_custom_call.1} parent=55 // pred_region
          %s1624 = sand.u32 %s120, 1
          %s1625 = scalar_lea.sflag [#allocation4], %s1624
          %s1626 = sand.u32 %s120, 1
          %s1627 = smul.addr %s1626, 128
          %s1628 = scalar_lea.vmem [#allocation8], %s1627
          %1629 = dma.done %s1625, 2048
        $region60: #{tpu_custom_call.1} parent=55 // pred_fallthru
          _
      $region56: #{tpu_custom_call.1} parent=5 // pred_fallthru
        _
    $region6: #{tpu_custom_call.1} parent=1 // loop_footer
      %s21 = sadd.s32 1, %s17
    $region7: #{tpu_custom_call.1} parent=1 // loop_footer_branch
      %16 = sbr.rel target = $region3
    $region8: #{tpu_custom_call.1} parent=1 // loop_exit
      _
    %1630 = vsyncpa [#allocation3], 1
    %s1631 = scalar_lea.sflag [#allocation3], 1
    %1632 = vsyncpa %s1631, 1
    %1633 = vsyncpa [#allocation6], 1
    %1634 = vsyncpa [#allocation4], 1
    %s1635 = scalar_lea.sflag [#allocation4], 1
    %1636 = vsyncpa %s1635, 1

</llo_original>
